<compile_context>
chip_gen: v5e
topology: v5e:2x2
jax: 0.10.0
libtpu: 0.0.40
codegen_flags: <defaults>
</compile_context>

<pallas_src>
import jax
import jax.numpy as jnp
from jax.experimental import pallas as pl
from jax.experimental.pallas import tpu as pltpu

C_IN = 64     # encoder input / output channels
C_MID = 112   # hidden channels
N_RES = 4     # residual 3-tap conv layers (cc1..cc4)


def _encoder_kernel(x_ref, w0_ref, b0_ref, wc_ref, bc_ref, w5_ref, b5_ref,
                    o_ref):
    x = x_ref[0]                                   # (C_IN, L) f32
    L = x.shape[-1]

    # cc0: 1x1 conv 64 -> 112, no activation.
    r = jnp.dot(w0_ref[...], x, preferred_element_type=jnp.float32)
    r = r + b0_ref[...]                            # (C_MID, L)

    # Boundary masks emulating the zero padding of the 3-tap convs (hoisted).
    lane = jax.lax.broadcasted_iota(jnp.int32, (C_MID, L), 1)
    left_edge = lane == 0
    right_edge = lane == (L - 1)

    # cc1..cc4: Conv1d(112->112, k=3, pad=1) + ReLU, then residual add.
    # Tap k of a PyTorch Conv1d(k=3, padding=1) reads input position l + k - 1.
    for i in range(N_RES):
        r_m1 = jnp.where(left_edge, 0.0, pltpu.roll(r, 1, axis=1))       # r[l-1]
        r_p1 = jnp.where(right_edge, 0.0, pltpu.roll(r, L - 1, axis=1))  # r[l+1]
        t = jnp.dot(wc_ref[i, 0], r_m1, preferred_element_type=jnp.float32)
        t = t + jnp.dot(wc_ref[i, 1], r, preferred_element_type=jnp.float32)
        t = t + jnp.dot(wc_ref[i, 2], r_p1, preferred_element_type=jnp.float32)
        t = jnp.maximum(t + bc_ref[i], 0.0)
        r = t + r

    # cc5: 1x1 conv 112 -> 64 (no activation); resg: global residual with x.
    t = jnp.dot(w5_ref[...], r, preferred_element_type=jnp.float32)
    t = t + b5_ref[...]
    o_ref[0] = (t + x).astype(o_ref.dtype)


def encoder_ai85cnn_pallas(x, w0, b0, wc, bc, w5, b5):
    """x: (N, 64, L) float32 -> (N, 64, L) float32."""
    N, C, L = x.shape
    assert C == C_IN

    flops = 2 * N * L * (C_IN * C_MID + N_RES * 3 * C_MID * C_MID
                         + C_MID * C_IN)
    param_bytes = 4 * (w0.size + b0.size + wc.size + bc.size + w5.size
                       + b5.size)
    cost = pl.CostEstimate(flops=flops, transcendentals=0,
                           bytes_accessed=4 * 2 * N * C_IN * L + param_bytes)

    const2 = lambda n: (0, 0)
    const3 = lambda n: (0, 0, 0)
    const4 = lambda n: (0, 0, 0, 0)
    return pl.pallas_call(
        _encoder_kernel,
        out_shape=jax.ShapeDtypeStruct((N, C_IN, L), jnp.float32),
        grid=(N,),
        in_specs=[
            pl.BlockSpec((1, C_IN, L), lambda n: (n, 0, 0)),      # x
            pl.BlockSpec((C_MID, C_IN), const2),                  # w0  (cc0)
            pl.BlockSpec((C_MID, 1), const2),                     # b0
            pl.BlockSpec((N_RES, 3, C_MID, C_MID), const4),       # wc  (cc1..4)
            pl.BlockSpec((N_RES, C_MID, 1), const3),              # bc
            pl.BlockSpec((C_IN, C_MID), const2),                  # w5  (cc5)
            pl.BlockSpec((C_IN, 1), const2),                      # b5
        ],
        out_specs=pl.BlockSpec((1, C_IN, L), lambda n: (n, 0, 0)),
        compiler_params=pltpu.CompilerParams(
            dimension_semantics=("parallel",)),
        cost_estimate=cost,
    )(x, w0, b0, wc, bc, w5, b5)


def _lpre(x):
    # TODO(synk): `layers.lpre` is not defined in the provided spec; treated as
    # an identity preprocessing that yields the (N, 64, L) tensor fed to the CNN.
    return x


@jax.jit
def encoder_forward(x, params):
    pre_d = _lpre(x)
    out = encoder_ai85cnn_pallas(pre_d, *params)
    return out, pre_d


def _reference(x, params):
    """Pure-JAX reference of the encoder_ai85cnn forward."""
    w0, b0, wc, bc, w5, b5 = params
    conv1x1 = lambda z, w, b: jnp.einsum('oc,ncl->nol', w, z) + b[None]

    def conv3(z, w, b):                       # w: (3, Co, Ci), b: (Co, 1)
        L = z.shape[-1]
        zp = jnp.pad(z, ((0, 0), (0, 0), (1, 1)))
        y = (jnp.einsum('oc,ncl->nol', w[0], zp[..., 0:L])
             + jnp.einsum('oc,ncl->nol', w[1], zp[..., 1:L + 1])
             + jnp.einsum('oc,ncl->nol', w[2], zp[..., 2:L + 2]))
        return jnp.maximum(y + b[None], 0.0)

    r = conv1x1(x, w0, b0)
    for i in range(N_RES):
        r = conv3(r, wc[i], bc[i]) + r
    return conv1x1(r, w5, b5) + x


if __name__ == "__main__":
    key = jax.random.PRNGKey(0)
    ks = jax.random.split(key, 7)

    # Small test shape consistent with the module (64 input channels required).
    N, L = 2, 128
    x = jax.random.normal(ks[0], (N, C_IN, L), dtype=jnp.float32)

    # Parameters.  PyTorch Conv1d weight is (C_out, C_in, K); here the 1x1
    # convs are stored as (C_out, C_in), the 3-tap convs as
    # (layer, K, C_out, C_in) (wc[i, k] == torch_weight_i[:, :, k]), and the
    # biases as (C_out, 1) for lane-broadcast inside the kernel.
    w0 = jax.random.normal(ks[1], (C_MID, C_IN), jnp.float32) * 0.05
    b0 = jax.random.normal(ks[2], (C_MID, 1), jnp.float32) * 0.05
    wc = jax.random.normal(ks[3], (N_RES, 3, C_MID, C_MID), jnp.float32) * 0.05
    bc = jax.random.normal(ks[4], (N_RES, C_MID, 1), jnp.float32) * 0.05
    w5 = jax.random.normal(ks[5], (C_IN, C_MID), jnp.float32) * 0.05
    b5 = jax.random.normal(ks[6], (C_IN, 1), jnp.float32) * 0.05
    params = (w0, b0, wc, bc, w5, b5)

    out, pre_d = encoder_forward(x, params)
    out = jax.block_until_ready(out)

    out_ref = _reference(x, params)
    assert out.shape == (N, C_IN, L), out.shape
    assert pre_d.shape == x.shape, pre_d.shape
    assert jnp.allclose(out, out_ref, atol=1e-3, rtol=1e-3), (
        float(jnp.max(jnp.abs(out - out_ref))))

    print("KERNEL_OK")
</pallas_src>

<mosaic_0001>
module attributes {stable_mosaic.version = 11 : i64} {
  func.func @_encoder_kernel(%arg0: i32, %arg1: memref<1x64x128xf32, #tpu.memory_space<vmem>>, %arg2: memref<112x64xf32, #tpu.memory_space<vmem>>, %arg3: memref<112x1xf32, #tpu.memory_space<vmem>>, %arg4: memref<4x3x112x112xf32, #tpu.memory_space<vmem>>, %arg5: memref<4x112x1xf32, #tpu.memory_space<vmem>>, %arg6: memref<64x112xf32, #tpu.memory_space<vmem>>, %arg7: memref<64x1xf32, #tpu.memory_space<vmem>>, %arg8: memref<1x64x128xf32, #tpu.memory_space<vmem>>) attributes {dimension_semantics = [#tpu.dimension_semantics<parallel>], iteration_bounds = array<i64: 2>, scalar_prefetch = 0 : i64, scratch_operands = 0 : i64, tpu.core_type = #tpu.core_type<tc>, window_params = [{transform_indices = @transform_0, window_bounds = array<i64: 1, 64, 128>}, {pipeline_mode = #tpu.pipeline_mode<synchronous>, transform_indices = @transform_1, window_bounds = array<i64: 112, 64>}, {pipeline_mode = #tpu.pipeline_mode<synchronous>, transform_indices = @transform_2, window_bounds = array<i64: 112, 1>}, {pipeline_mode = #tpu.pipeline_mode<synchronous>, transform_indices = @transform_3, window_bounds = array<i64: 4, 3, 112, 112>}, {pipeline_mode = #tpu.pipeline_mode<synchronous>, transform_indices = @transform_4, window_bounds = array<i64: 4, 112, 1>}, {pipeline_mode = #tpu.pipeline_mode<synchronous>, transform_indices = @transform_5, window_bounds = array<i64: 64, 112>}, {pipeline_mode = #tpu.pipeline_mode<synchronous>, transform_indices = @transform_6, window_bounds = array<i64: 64, 1>}, {transform_indices = @transform_7, window_bounds = array<i64: 1, 64, 128>}]} {
    %c0 = arith.constant 0 : index
    %c0_0 = arith.constant 0 : index
    %c0_1 = arith.constant 0 : index
    %0 = vector.load %arg1[%c0, %c0_0, %c0_1] : memref<1x64x128xf32, #tpu.memory_space<vmem>>, vector<1x64x128xf32>
    %1 = vector.shape_cast %0 : vector<1x64x128xf32> to vector<64x128xf32>
    %c0_2 = arith.constant 0 : index
    %c0_3 = arith.constant 0 : index
    %2 = vector.load %arg2[%c0_2, %c0_3] : memref<112x64xf32, #tpu.memory_space<vmem>>, vector<112x64xf32>
    %cst = arith.constant dense<0.000000e+00> : vector<112x128xf32>
    %3 = tpu.matmul %2, %1, %cst {dimension_numbers = #tpu.dot_dimension_numbers<[1], [0], [0], [1], [0, 0, 1, 1], [], []>} : vector<112x64xf32>, vector<64x128xf32>, vector<112x128xf32> -> vector<112x128xf32>
    %c0_4 = arith.constant 0 : index
    %c0_5 = arith.constant 0 : index
    %4 = vector.load %arg3[%c0_4, %c0_5] : memref<112x1xf32, #tpu.memory_space<vmem>>, vector<112x1xf32>
    %5 = vector.broadcast %4 : vector<112x1xf32> to vector<112x128xf32>
    %6 = arith.addf %3, %5 : vector<112x128xf32>
    %7 = tpu.iota {dimensions = array<i32: 1>} : vector<112x128xi32>
    %c0_i32 = arith.constant 0 : i32
    %8 = vector.broadcast %c0_i32 : i32 to vector<112x128xi32>
    %9 = arith.cmpi eq, %7, %8 : vector<112x128xi32>
    %c127_i32 = arith.constant 127 : i32
    %10 = vector.broadcast %c127_i32 : i32 to vector<112x128xi32>
    %11 = arith.cmpi eq, %7, %10 : vector<112x128xi32>
    %c1_i32 = arith.constant 1 : i32
    %12 = tpu.dynamic_rotate %6 by %c1_i32 dim 1 : vector<112x128xf32>, i32 -> vector<112x128xf32>
    %cst_6 = arith.constant 0.000000e+00 : f32
    %13 = vector.broadcast %cst_6 : f32 to vector<112x128xf32>
    %14 = arith.select %9, %13, %12 : vector<112x128xi1>, vector<112x128xf32>
    %c127_i32_7 = arith.constant 127 : i32
    %15 = tpu.dynamic_rotate %6 by %c127_i32_7 dim 1 : vector<112x128xf32>, i32 -> vector<112x128xf32>
    %cst_8 = arith.constant 0.000000e+00 : f32
    %16 = vector.broadcast %cst_8 : f32 to vector<112x128xf32>
    %17 = arith.select %11, %16, %15 : vector<112x128xi1>, vector<112x128xf32>
    %c0_9 = arith.constant 0 : index
    %c0_10 = arith.constant 0 : index
    %c0_11 = arith.constant 0 : index
    %c0_12 = arith.constant 0 : index
    %18 = vector.load %arg4[%c0_9, %c0_10, %c0_11, %c0_12] : memref<4x3x112x112xf32, #tpu.memory_space<vmem>>, vector<1x1x112x112xf32>
    %19 = vector.shape_cast %18 : vector<1x1x112x112xf32> to vector<112x112xf32>
    %cst_13 = arith.constant dense<0.000000e+00> : vector<112x128xf32>
    %20 = tpu.matmul %19, %14, %cst_13 {dimension_numbers = #tpu.dot_dimension_numbers<[1], [0], [0], [1], [0, 0, 1, 1], [], []>} : vector<112x112xf32>, vector<112x128xf32>, vector<112x128xf32> -> vector<112x128xf32>
    %c0_14 = arith.constant 0 : index
    %c1 = arith.constant 1 : index
    %c0_15 = arith.constant 0 : index
    %c0_16 = arith.constant 0 : index
    %21 = vector.load %arg4[%c0_14, %c1, %c0_15, %c0_16] : memref<4x3x112x112xf32, #tpu.memory_space<vmem>>, vector<1x1x112x112xf32>
    %22 = vector.shape_cast %21 : vector<1x1x112x112xf32> to vector<112x112xf32>
    %cst_17 = arith.constant dense<0.000000e+00> : vector<112x128xf32>
    %23 = tpu.matmul %22, %6, %cst_17 {dimension_numbers = #tpu.dot_dimension_numbers<[1], [0], [0], [1], [0, 0, 1, 1], [], []>} : vector<112x112xf32>, vector<112x128xf32>, vector<112x128xf32> -> vector<112x128xf32>
    %24 = arith.addf %20, %23 : vector<112x128xf32>
    %c0_18 = arith.constant 0 : index
    %c2 = arith.constant 2 : index
    %c0_19 = arith.constant 0 : index
    %c0_20 = arith.constant 0 : index
    %25 = vector.load %arg4[%c0_18, %c2, %c0_19, %c0_20] : memref<4x3x112x112xf32, #tpu.memory_space<vmem>>, vector<1x1x112x112xf32>
    %26 = vector.shape_cast %25 : vector<1x1x112x112xf32> to vector<112x112xf32>
    %cst_21 = arith.constant dense<0.000000e+00> : vector<112x128xf32>
    %27 = tpu.matmul %26, %17, %cst_21 {dimension_numbers = #tpu.dot_dimension_numbers<[1], [0], [0], [1], [0, 0, 1, 1], [], []>} : vector<112x112xf32>, vector<112x128xf32>, vector<112x128xf32> -> vector<112x128xf32>
    %28 = arith.addf %24, %27 : vector<112x128xf32>
    %c0_22 = arith.constant 0 : index
    %c0_23 = arith.constant 0 : index
    %c0_24 = arith.constant 0 : index
    %29 = vector.load %arg5[%c0_22, %c0_23, %c0_24] : memref<4x112x1xf32, #tpu.memory_space<vmem>>, vector<1x112x1xf32>
    %30 = vector.shape_cast %29 : vector<1x112x1xf32> to vector<112x1xf32>
    %31 = vector.broadcast %30 : vector<112x1xf32> to vector<112x128xf32>
    %32 = arith.addf %28, %31 : vector<112x128xf32>
    %cst_25 = arith.constant 0.000000e+00 : f32
    %33 = vector.broadcast %cst_25 : f32 to vector<112x128xf32>
    %34 = arith.maximumf %32, %33 : vector<112x128xf32>
    %35 = arith.addf %34, %6 : vector<112x128xf32>
    %c1_i32_26 = arith.constant 1 : i32
    %36 = tpu.dynamic_rotate %35 by %c1_i32_26 dim 1 : vector<112x128xf32>, i32 -> vector<112x128xf32>
    %cst_27 = arith.constant 0.000000e+00 : f32
    %37 = vector.broadcast %cst_27 : f32 to vector<112x128xf32>
    %38 = arith.select %9, %37, %36 : vector<112x128xi1>, vector<112x128xf32>
    %c127_i32_28 = arith.constant 127 : i32
    %39 = tpu.dynamic_rotate %35 by %c127_i32_28 dim 1 : vector<112x128xf32>, i32 -> vector<112x128xf32>
    %cst_29 = arith.constant 0.000000e+00 : f32
    %40 = vector.broadcast %cst_29 : f32 to vector<112x128xf32>
    %41 = arith.select %11, %40, %39 : vector<112x128xi1>, vector<112x128xf32>
    %c1_30 = arith.constant 1 : index
    %c0_31 = arith.constant 0 : index
    %c0_32 = arith.constant 0 : index
    %c0_33 = arith.constant 0 : index
    %42 = vector.load %arg4[%c1_30, %c0_31, %c0_32, %c0_33] : memref<4x3x112x112xf32, #tpu.memory_space<vmem>>, vector<1x1x112x112xf32>
    %43 = vector.shape_cast %42 : vector<1x1x112x112xf32> to vector<112x112xf32>
    %cst_34 = arith.constant dense<0.000000e+00> : vector<112x128xf32>
    %44 = tpu.matmul %43, %38, %cst_34 {dimension_numbers = #tpu.dot_dimension_numbers<[1], [0], [0], [1], [0, 0, 1, 1], [], []>} : vector<112x112xf32>, vector<112x128xf32>, vector<112x128xf32> -> vector<112x128xf32>
    %c1_35 = arith.constant 1 : index
    %c1_36 = arith.constant 1 : index
    %c0_37 = arith.constant 0 : index
    %c0_38 = arith.constant 0 : index
    %45 = vector.load %arg4[%c1_35, %c1_36, %c0_37, %c0_38] : memref<4x3x112x112xf32, #tpu.memory_space<vmem>>, vector<1x1x112x112xf32>
    %46 = vector.shape_cast %45 : vector<1x1x112x112xf32> to vector<112x112xf32>
    %cst_39 = arith.constant dense<0.000000e+00> : vector<112x128xf32>
    %47 = tpu.matmul %46, %35, %cst_39 {dimension_numbers = #tpu.dot_dimension_numbers<[1], [0], [0], [1], [0, 0, 1, 1], [], []>} : vector<112x112xf32>, vector<112x128xf32>, vector<112x128xf32> -> vector<112x128xf32>
    %48 = arith.addf %44, %47 : vector<112x128xf32>
    %c1_40 = arith.constant 1 : index
    %c2_41 = arith.constant 2 : index
    %c0_42 = arith.constant 0 : index
    %c0_43 = arith.constant 0 : index
    %49 = vector.load %arg4[%c1_40, %c2_41, %c0_42, %c0_43] : memref<4x3x112x112xf32, #tpu.memory_space<vmem>>, vector<1x1x112x112xf32>
    %50 = vector.shape_cast %49 : vector<1x1x112x112xf32> to vector<112x112xf32>
    %cst_44 = arith.constant dense<0.000000e+00> : vector<112x128xf32>
    %51 = tpu.matmul %50, %41, %cst_44 {dimension_numbers = #tpu.dot_dimension_numbers<[1], [0], [0], [1], [0, 0, 1, 1], [], []>} : vector<112x112xf32>, vector<112x128xf32>, vector<112x128xf32> -> vector<112x128xf32>
    %52 = arith.addf %48, %51 : vector<112x128xf32>
    %c1_45 = arith.constant 1 : index
    %c0_46 = arith.constant 0 : index
    %c0_47 = arith.constant 0 : index
    %53 = vector.load %arg5[%c1_45, %c0_46, %c0_47] : memref<4x112x1xf32, #tpu.memory_space<vmem>>, vector<1x112x1xf32>
    %54 = vector.shape_cast %53 : vector<1x112x1xf32> to vector<112x1xf32>
    %55 = vector.broadcast %54 : vector<112x1xf32> to vector<112x128xf32>
    %56 = arith.addf %52, %55 : vector<112x128xf32>
    %cst_48 = arith.constant 0.000000e+00 : f32
    %57 = vector.broadcast %cst_48 : f32 to vector<112x128xf32>
    %58 = arith.maximumf %56, %57 : vector<112x128xf32>
    %59 = arith.addf %58, %35 : vector<112x128xf32>
    %c1_i32_49 = arith.constant 1 : i32
    %60 = tpu.dynamic_rotate %59 by %c1_i32_49 dim 1 : vector<112x128xf32>, i32 -> vector<112x128xf32>
    %cst_50 = arith.constant 0.000000e+00 : f32
    %61 = vector.broadcast %cst_50 : f32 to vector<112x128xf32>
    %62 = arith.select %9, %61, %60 : vector<112x128xi1>, vector<112x128xf32>
    %c127_i32_51 = arith.constant 127 : i32
    %63 = tpu.dynamic_rotate %59 by %c127_i32_51 dim 1 : vector<112x128xf32>, i32 -> vector<112x128xf32>
    %cst_52 = arith.constant 0.000000e+00 : f32
    %64 = vector.broadcast %cst_52 : f32 to vector<112x128xf32>
    %65 = arith.select %11, %64, %63 : vector<112x128xi1>, vector<112x128xf32>
    %c2_53 = arith.constant 2 : index
    %c0_54 = arith.constant 0 : index
    %c0_55 = arith.constant 0 : index
    %c0_56 = arith.constant 0 : index
    %66 = vector.load %arg4[%c2_53, %c0_54, %c0_55, %c0_56] : memref<4x3x112x112xf32, #tpu.memory_space<vmem>>, vector<1x1x112x112xf32>
    %67 = vector.shape_cast %66 : vector<1x1x112x112xf32> to vector<112x112xf32>
    %cst_57 = arith.constant dense<0.000000e+00> : vector<112x128xf32>
    %68 = tpu.matmul %67, %62, %cst_57 {dimension_numbers = #tpu.dot_dimension_numbers<[1], [0], [0], [1], [0, 0, 1, 1], [], []>} : vector<112x112xf32>, vector<112x128xf32>, vector<112x128xf32> -> vector<112x128xf32>
    %c2_58 = arith.constant 2 : index
    %c1_59 = arith.constant 1 : index
    %c0_60 = arith.constant 0 : index
    %c0_61 = arith.constant 0 : index
    %69 = vector.load %arg4[%c2_58, %c1_59, %c0_60, %c0_61] : memref<4x3x112x112xf32, #tpu.memory_space<vmem>>, vector<1x1x112x112xf32>
    %70 = vector.shape_cast %69 : vector<1x1x112x112xf32> to vector<112x112xf32>
    %cst_62 = arith.constant dense<0.000000e+00> : vector<112x128xf32>
    %71 = tpu.matmul %70, %59, %cst_62 {dimension_numbers = #tpu.dot_dimension_numbers<[1], [0], [0], [1], [0, 0, 1, 1], [], []>} : vector<112x112xf32>, vector<112x128xf32>, vector<112x128xf32> -> vector<112x128xf32>
    %72 = arith.addf %68, %71 : vector<112x128xf32>
    %c2_63 = arith.constant 2 : index
    %c2_64 = arith.constant 2 : index
    %c0_65 = arith.constant 0 : index
    %c0_66 = arith.constant 0 : index
    %73 = vector.load %arg4[%c2_63, %c2_64, %c0_65, %c0_66] : memref<4x3x112x112xf32, #tpu.memory_space<vmem>>, vector<1x1x112x112xf32>
    %74 = vector.shape_cast %73 : vector<1x1x112x112xf32> to vector<112x112xf32>
    %cst_67 = arith.constant dense<0.000000e+00> : vector<112x128xf32>
    %75 = tpu.matmul %74, %65, %cst_67 {dimension_numbers = #tpu.dot_dimension_numbers<[1], [0], [0], [1], [0, 0, 1, 1], [], []>} : vector<112x112xf32>, vector<112x128xf32>, vector<112x128xf32> -> vector<112x128xf32>
    %76 = arith.addf %72, %75 : vector<112x128xf32>
    %c2_68 = arith.constant 2 : index
    %c0_69 = arith.constant 0 : index
    %c0_70 = arith.constant 0 : index
    %77 = vector.load %arg5[%c2_68, %c0_69, %c0_70] : memref<4x112x1xf32, #tpu.memory_space<vmem>>, vector<1x112x1xf32>
    %78 = vector.shape_cast %77 : vector<1x112x1xf32> to vector<112x1xf32>
    %79 = vector.broadcast %78 : vector<112x1xf32> to vector<112x128xf32>
    %80 = arith.addf %76, %79 : vector<112x128xf32>
    %cst_71 = arith.constant 0.000000e+00 : f32
    %81 = vector.broadcast %cst_71 : f32 to vector<112x128xf32>
    %82 = arith.maximumf %80, %81 : vector<112x128xf32>
    %83 = arith.addf %82, %59 : vector<112x128xf32>
    %c1_i32_72 = arith.constant 1 : i32
    %84 = tpu.dynamic_rotate %83 by %c1_i32_72 dim 1 : vector<112x128xf32>, i32 -> vector<112x128xf32>
    %cst_73 = arith.constant 0.000000e+00 : f32
    %85 = vector.broadcast %cst_73 : f32 to vector<112x128xf32>
    %86 = arith.select %9, %85, %84 : vector<112x128xi1>, vector<112x128xf32>
    %c127_i32_74 = arith.constant 127 : i32
    %87 = tpu.dynamic_rotate %83 by %c127_i32_74 dim 1 : vector<112x128xf32>, i32 -> vector<112x128xf32>
    %cst_75 = arith.constant 0.000000e+00 : f32
    %88 = vector.broadcast %cst_75 : f32 to vector<112x128xf32>
    %89 = arith.select %11, %88, %87 : vector<112x128xi1>, vector<112x128xf32>
    %c3 = arith.constant 3 : index
    %c0_76 = arith.constant 0 : index
    %c0_77 = arith.constant 0 : index
    %c0_78 = arith.constant 0 : index
    %90 = vector.load %arg4[%c3, %c0_76, %c0_77, %c0_78] : memref<4x3x112x112xf32, #tpu.memory_space<vmem>>, vector<1x1x112x112xf32>
    %91 = vector.shape_cast %90 : vector<1x1x112x112xf32> to vector<112x112xf32>
    %cst_79 = arith.constant dense<0.000000e+00> : vector<112x128xf32>
    %92 = tpu.matmul %91, %86, %cst_79 {dimension_numbers = #tpu.dot_dimension_numbers<[1], [0], [0], [1], [0, 0, 1, 1], [], []>} : vector<112x112xf32>, vector<112x128xf32>, vector<112x128xf32> -> vector<112x128xf32>
    %c3_80 = arith.constant 3 : index
    %c1_81 = arith.constant 1 : index
    %c0_82 = arith.constant 0 : index
    %c0_83 = arith.constant 0 : index
    %93 = vector.load %arg4[%c3_80, %c1_81, %c0_82, %c0_83] : memref<4x3x112x112xf32, #tpu.memory_space<vmem>>, vector<1x1x112x112xf32>
    %94 = vector.shape_cast %93 : vector<1x1x112x112xf32> to vector<112x112xf32>
    %cst_84 = arith.constant dense<0.000000e+00> : vector<112x128xf32>
    %95 = tpu.matmul %94, %83, %cst_84 {dimension_numbers = #tpu.dot_dimension_numbers<[1], [0], [0], [1], [0, 0, 1, 1], [], []>} : vector<112x112xf32>, vector<112x128xf32>, vector<112x128xf32> -> vector<112x128xf32>
    %96 = arith.addf %92, %95 : vector<112x128xf32>
    %c3_85 = arith.constant 3 : index
    %c2_86 = arith.constant 2 : index
    %c0_87 = arith.constant 0 : index
    %c0_88 = arith.constant 0 : index
    %97 = vector.load %arg4[%c3_85, %c2_86, %c0_87, %c0_88] : memref<4x3x112x112xf32, #tpu.memory_space<vmem>>, vector<1x1x112x112xf32>
    %98 = vector.shape_cast %97 : vector<1x1x112x112xf32> to vector<112x112xf32>
    %cst_89 = arith.constant dense<0.000000e+00> : vector<112x128xf32>
    %99 = tpu.matmul %98, %89, %cst_89 {dimension_numbers = #tpu.dot_dimension_numbers<[1], [0], [0], [1], [0, 0, 1, 1], [], []>} : vector<112x112xf32>, vector<112x128xf32>, vector<112x128xf32> -> vector<112x128xf32>
    %100 = arith.addf %96, %99 : vector<112x128xf32>
    %c3_90 = arith.constant 3 : index
    %c0_91 = arith.constant 0 : index
    %c0_92 = arith.constant 0 : index
    %101 = vector.load %arg5[%c3_90, %c0_91, %c0_92] : memref<4x112x1xf32, #tpu.memory_space<vmem>>, vector<1x112x1xf32>
    %102 = vector.shape_cast %101 : vector<1x112x1xf32> to vector<112x1xf32>
    %103 = vector.broadcast %102 : vector<112x1xf32> to vector<112x128xf32>
    %104 = arith.addf %100, %103 : vector<112x128xf32>
    %cst_93 = arith.constant 0.000000e+00 : f32
    %105 = vector.broadcast %cst_93 : f32 to vector<112x128xf32>
    %106 = arith.maximumf %104, %105 : vector<112x128xf32>
    %107 = arith.addf %106, %83 : vector<112x128xf32>
    %c0_94 = arith.constant 0 : index
    %c0_95 = arith.constant 0 : index
    %108 = vector.load %arg6[%c0_94, %c0_95] : memref<64x112xf32, #tpu.memory_space<vmem>>, vector<64x112xf32>
    %cst_96 = arith.constant dense<0.000000e+00> : vector<64x128xf32>
    %109 = tpu.matmul %108, %107, %cst_96 {dimension_numbers = #tpu.dot_dimension_numbers<[1], [0], [0], [1], [0, 0, 1, 1], [], []>} : vector<64x112xf32>, vector<112x128xf32>, vector<64x128xf32> -> vector<64x128xf32>
    %c0_97 = arith.constant 0 : index
    %c0_98 = arith.constant 0 : index
    %110 = vector.load %arg7[%c0_97, %c0_98] : memref<64x1xf32, #tpu.memory_space<vmem>>, vector<64x1xf32>
    %111 = vector.broadcast %110 : vector<64x1xf32> to vector<64x128xf32>
    %112 = arith.addf %109, %111 : vector<64x128xf32>
    %113 = arith.addf %112, %1 : vector<64x128xf32>
    %c0_99 = arith.constant 0 : index
    %c0_100 = arith.constant 0 : index
    %c0_101 = arith.constant 0 : index
    %114 = vector.load %arg8[%c0_99, %c0_100, %c0_101] : memref<1x64x128xf32, #tpu.memory_space<vmem>>, vector<1x64x128xf32>
    %115 = vector.shape_cast %114 : vector<1x64x128xf32> to vector<64x128xf32>
    %116 = vector.shape_cast %113 : vector<64x128xf32> to vector<1x64x128xf32>
    tpu.vector_store %arg8[%c0_99, %c0_100, %c0_101], %116 {strides = array<i32>} : memref<1x64x128xf32, #tpu.memory_space<vmem>>, vector<1x64x128xf32>,
    return
  }
  func.func @transform_0(%arg0: i32) -> (i32, i32, i32) {
    %c0_i32 = arith.constant 0 : i32
    %c0_i32_0 = arith.constant 0 : i32
    %c0_i32_1 = arith.constant 0 : i32
    return %arg0, %c0_i32, %c0_i32_0 : i32, i32, i32
  }
  func.func @transform_1(%arg0: i32) -> (i32, i32) {
    %c0_i32 = arith.constant 0 : i32
    %c0_i32_0 = arith.constant 0 : i32
    %c0_i32_1 = arith.constant 0 : i32
    return %c0_i32, %c0_i32_0 : i32, i32
  }
  func.func @transform_2(%arg0: i32) -> (i32, i32) {
    %c0_i32 = arith.constant 0 : i32
    %c0_i32_0 = arith.constant 0 : i32
    %c0_i32_1 = arith.constant 0 : i32
    return %c0_i32, %c0_i32_0 : i32, i32
  }
  func.func @transform_3(%arg0: i32) -> (i32, i32, i32, i32) {
    %c0_i32 = arith.constant 0 : i32
    %c0_i32_0 = arith.constant 0 : i32
    %c0_i32_1 = arith.constant 0 : i32
    %c0_i32_2 = arith.constant 0 : i32
    %c0_i32_3 = arith.constant 0 : i32
    return %c0_i32, %c0_i32_0, %c0_i32_1, %c0_i32_2 : i32, i32, i32, i32
  }
  func.func @transform_4(%arg0: i32) -> (i32, i32, i32) {
    %c0_i32 = arith.constant 0 : i32
    %c0_i32_0 = arith.constant 0 : i32
    %c0_i32_1 = arith.constant 0 : i32
    %c0_i32_2 = arith.constant 0 : i32
    return %c0_i32, %c0_i32_0, %c0_i32_1 : i32, i32, i32
  }
  func.func @transform_5(%arg0: i32) -> (i32, i32) {
    %c0_i32 = arith.constant 0 : i32
    %c0_i32_0 = arith.constant 0 : i32
    %c0_i32_1 = arith.constant 0 : i32
    return %c0_i32, %c0_i32_0 : i32, i32
  }
  func.func @transform_6(%arg0: i32) -> (i32, i32) {
    %c0_i32 = arith.constant 0 : i32
    %c0_i32_0 = arith.constant 0 : i32
    %c0_i32_1 = arith.constant 0 : i32
    return %c0_i32, %c0_i32_0 : i32, i32
  }
  func.func @transform_7(%arg0: i32) -> (i32, i32, i32) {
    %c0_i32 = arith.constant 0 : i32
    %c0_i32_0 = arith.constant 0 : i32
    %c0_i32_1 = arith.constant 0 : i32
    return %arg0, %c0_i32, %c0_i32_0 : i32, i32, i32
  }
}

</mosaic_0001>

<llo_original>
// kernel: encoder_forward.1
$region0: #{encoder_forward.1}
  #allocation0 [shape = 'u32[]', space=smem, size = 0x4, offset = 0x4, fixed_abs, tag = 'smem constant byte address 0x4 - core index']
  #allocation1 [shape = 'u32[72,128]{1,0:T(1,128)}', space=vmem, size = 0x9000, scoped, tag = 'internal scratch']
  %s0 = inlined_call_operand.vmem [shape: f32[2,64,128], index: 0, kind: input, shape index: {}]
  %s1 = inlined_call_operand.vmem [shape: f32[112,64], index: 1, kind: input, shape index: {}]
  %s2 = inlined_call_operand.vmem [shape: f32[112,1], index: 2, kind: input, shape index: {}]
  %s3 = inlined_call_operand.hbm [shape: f32[4,3,112,112], index: 3, kind: input, shape index: {}]
  %s4 = inlined_call_operand.vmem [shape: f32[4,112,1], index: 4, kind: input, shape index: {}]
  %s5 = inlined_call_operand.vmem [shape: f32[64,112], index: 5, kind: input, shape index: {}]
  %s6 = inlined_call_operand.vmem [shape: f32[64,1], index: 6, kind: input, shape index: {}]
  %s7 = inlined_call_operand.hbm [shape: f32[2,64,128], index: 7, kind: output, shape index: {}]
  %s8 = sld [smem:[#allocation0]]
  $region65: #{encoder_forward.1} parent=0
    _
  %s10 = ssub.s32 1, %s8
  %s11 = scalar_select 0, %s10, %s8
  $region1: #{encoder_forward.1} parent=0
    #allocation2 [shape = 'u8[688128]{0}', space=vmem, size = 0xa8000, scoped, tag = 'input window, operand 3, single buffered']
    #allocation3 [shape = 's32[2]{0}', space=sflag, size = 0x8, scoped, tag = 'scoped memory for encoder_forward.1']
    #allocation4 [shape = 's32[2]{0}', space=sflag, size = 0x8, scoped, tag = 'scoped memory for encoder_forward.1']
    #allocation5 [shape = 'u8[65536]{0}', space=vmem, size = 0x10000, scoped, tag = 'output window, operand 0']
    %12 = vsyncpa [#allocation3], 0
    %13 = vsyncpa [#allocation4], 0
    %s14 = scalar_lea.sflag [#allocation4], 1
    %15 = vsyncpa %s14, 0
    loop: start=0, step=1, limit=4
    $region2: #{encoder_forward.1} parent=1 // loop_pre_header
      _
    $region3: #{encoder_forward.1} parent=1 // loop_header
      %s17 = sphi 0, %s21
      %p18 = scmp.ge.s32.totalorder %s17, 4
      %s27 = sphi 0, %s29
      %s30 = sphi 0, %s27
      %s31 = sphi 0, %s30
      %s47 = sphi 0, %s31
      %s51 = sphi 0, %s51
      %s53 = sphi 0, %s51
      %s54 = sphi 0, %s53
      %s68 = sphi 0, %s54
      %s72 = sphi 0, %s72
      %s74 = sphi 0, %s72
      %s75 = sphi 0, %s74
      %s89 = sphi 0, %s75
      %s93 = sphi 0, %s93
      %s95 = sphi 0, %s93
      %s96 = sphi 0, %s95
      %s110 = sphi 0, %s96
      %s114 = sphi 0, %s114
      %s116 = sphi 0, %s114
      %s117 = sphi 0, %s116
      %s131 = sphi 0, %s117
      %s135 = sphi 0, %s135
      %s137 = sphi 0, %s135
      %s138 = sphi 0, %s137
      %s152 = sphi 0, %s138
      %s156 = sphi 0, %s156
      %s158 = sphi 0, %s156
      %s159 = sphi 0, %s158
      %s173 = sphi 0, %s159
      %s179 = sphi 0, %s181
      %s182 = sphi 0, %s179
      %s183 = sphi 0, %s182
      %s199 = sphi 0, %s183
    $region4: #{encoder_forward.1} parent=1 // loop_header_branch
      %20 = sbr.rel (%p18) target = $region8
    $region5: #{encoder_forward.1} parent=1 // loop_body
      %s22 = ssub.s32 %s17, 1
      %s23 = ssub.s32 %s17, 2
      %s24 = sadd.s32 %s17, 1
      %s25 = ssub.s32 %s17, %s24
      %p26 = scmp.eq.s32.totalorder %s25, 0
      %s28 = sadd.s32 %s27, 1
      %s29 = scalar_select %p26, %s27, %s28
      %p32 = pneg %p26
      %p33 = scmp.eq.s32.totalorder %s17, 1
      %p34 = por %p32, %p33
      %p35 = scmp.ne.s32.totalorder %s27, %s30
      %p36 = scmp.eq.s32.totalorder %s17, 0
      %p37 = por %p35, %p36
      %p38 = scmp.ne.s32.totalorder %s27, %s30
      %p39 = scmp.eq.s32.totalorder %s22, 1
      %p40 = por %p38, %p39
      %p41 = scmp.ne.s32.totalorder %s30, %s31
      %p42 = scmp.eq.s32.totalorder %s22, 0
      %p43 = por %p41, %p42
      %p44 = scmp.ne.s32.totalorder %s30, %s31
      %p45 = scmp.eq.s32.totalorder %s23, 1
      %p46 = por %p44, %p45
      %p48 = scmp.ne.s32.totalorder %s31, %s47
      %p49 = scmp.eq.s32.totalorder %s23, 0
      %p50 = por %p48, %p49
      %s52 = sadd.s32 %s51, 1
      %p55 = scmp.eq.s32.totalorder %s17, 1
      %p56 = scmp.ne.s32.totalorder %s51, %s53
      %p57 = scmp.eq.s32.totalorder %s17, 0
      %p58 = por %p56, %p57
      %p59 = scmp.ne.s32.totalorder %s51, %s53
      %p60 = scmp.eq.s32.totalorder %s22, 1
      %p61 = por %p59, %p60
      %p62 = scmp.ne.s32.totalorder %s53, %s54
      %p63 = scmp.eq.s32.totalorder %s22, 0
      %p64 = por %p62, %p63
      %p65 = scmp.ne.s32.totalorder %s53, %s54
      %p66 = scmp.eq.s32.totalorder %s23, 1
      %p67 = por %p65, %p66
      %p69 = scmp.ne.s32.totalorder %s54, %s68
      %p70 = scmp.eq.s32.totalorder %s23, 0
      %p71 = por %p69, %p70
      %s73 = sadd.s32 %s72, 1
      %p76 = scmp.eq.s32.totalorder %s17, 1
      %p77 = scmp.ne.s32.totalorder %s72, %s74
      %p78 = scmp.eq.s32.totalorder %s17, 0
      %p79 = por %p77, %p78
      %p80 = scmp.ne.s32.totalorder %s72, %s74
      %p81 = scmp.eq.s32.totalorder %s22, 1
      %p82 = por %p80, %p81
      %p83 = scmp.ne.s32.totalorder %s74, %s75
      %p84 = scmp.eq.s32.totalorder %s22, 0
      %p85 = por %p83, %p84
      %p86 = scmp.ne.s32.totalorder %s74, %s75
      %p87 = scmp.eq.s32.totalorder %s23, 1
      %p88 = por %p86, %p87
      %p90 = scmp.ne.s32.totalorder %s75, %s89
      %p91 = scmp.eq.s32.totalorder %s23, 0
      %p92 = por %p90, %p91
      %s94 = sadd.s32 %s93, 1
      %p97 = scmp.eq.s32.totalorder %s17, 1
      %p98 = scmp.ne.s32.totalorder %s93, %s95
      %p99 = scmp.eq.s32.totalorder %s17, 0
      %p100 = por %p98, %p99
      %p101 = scmp.ne.s32.totalorder %s93, %s95
      %p102 = scmp.eq.s32.totalorder %s22, 1
      %p103 = por %p101, %p102
      %p104 = scmp.ne.s32.totalorder %s95, %s96
      %p105 = scmp.eq.s32.totalorder %s22, 0
      %p106 = por %p104, %p105
      %p107 = scmp.ne.s32.totalorder %s95, %s96
      %p108 = scmp.eq.s32.totalorder %s23, 1
      %p109 = por %p107, %p108
      %p111 = scmp.ne.s32.totalorder %s96, %s110
      %p112 = scmp.eq.s32.totalorder %s23, 0
      %p113 = por %p111, %p112
      %s115 = sadd.s32 %s114, 1
      %p118 = scmp.eq.s32.totalorder %s17, 1
      %p119 = scmp.ne.s32.totalorder %s114, %s116
      %p120 = scmp.eq.s32.totalorder %s17, 0
      %p121 = por %p119, %p120
      %p122 = scmp.ne.s32.totalorder %s114, %s116
      %p123 = scmp.eq.s32.totalorder %s22, 1
      %p124 = por %p122, %p123
      %p125 = scmp.ne.s32.totalorder %s116, %s117
      %p126 = scmp.eq.s32.totalorder %s22, 0
      %p127 = por %p125, %p126
      %p128 = scmp.ne.s32.totalorder %s116, %s117
      %p129 = scmp.eq.s32.totalorder %s23, 1
      %p130 = por %p128, %p129
      %p132 = scmp.ne.s32.totalorder %s117, %s131
      %p133 = scmp.eq.s32.totalorder %s23, 0
      %p134 = por %p132, %p133
      %s136 = sadd.s32 %s135, 1
      %p139 = scmp.eq.s32.totalorder %s17, 1
      %p140 = scmp.ne.s32.totalorder %s135, %s137
      %p141 = scmp.eq.s32.totalorder %s17, 0
      %p142 = por %p140, %p141
      %p143 = scmp.ne.s32.totalorder %s135, %s137
      %p144 = scmp.eq.s32.totalorder %s22, 1
      %p145 = por %p143, %p144
      %p146 = scmp.ne.s32.totalorder %s137, %s138
      %p147 = scmp.eq.s32.totalorder %s22, 0
      %p148 = por %p146, %p147
      %p149 = scmp.ne.s32.totalorder %s137, %s138
      %p150 = scmp.eq.s32.totalorder %s23, 1
      %p151 = por %p149, %p150
      %p153 = scmp.ne.s32.totalorder %s138, %s152
      %p154 = scmp.eq.s32.totalorder %s23, 0
      %p155 = por %p153, %p154
      %s157 = sadd.s32 %s156, 1
      %p160 = scmp.eq.s32.totalorder %s17, 1
      %p161 = scmp.ne.s32.totalorder %s156, %s158
      %p162 = scmp.eq.s32.totalorder %s17, 0
      %p163 = por %p161, %p162
      %p164 = scmp.ne.s32.totalorder %s156, %s158
      %p165 = scmp.eq.s32.totalorder %s22, 1
      %p166 = por %p164, %p165
      %p167 = scmp.ne.s32.totalorder %s158, %s159
      %p168 = scmp.eq.s32.totalorder %s22, 0
      %p169 = por %p167, %p168
      %p170 = scmp.ne.s32.totalorder %s158, %s159
      %p171 = scmp.eq.s32.totalorder %s23, 1
      %p172 = por %p170, %p171
      %p174 = scmp.ne.s32.totalorder %s159, %s173
      %p175 = scmp.eq.s32.totalorder %s23, 0
      %p176 = por %p174, %p175
      %s177 = ssub.s32 %s17, %s24
      %p178 = scmp.eq.s32.totalorder %s177, 0
      %s180 = sadd.s32 %s179, 1
      %s181 = scalar_select %p178, %s179, %s180
      %p184 = pneg %p178
      %p185 = scmp.eq.s32.totalorder %s17, 1
      %p186 = por %p184, %p185
      %p187 = scmp.ne.s32.totalorder %s179, %s182
      %p188 = scmp.eq.s32.totalorder %s17, 0
      %p189 = por %p187, %p188
      %p190 = scmp.ne.s32.totalorder %s179, %s182
      %p191 = scmp.eq.s32.totalorder %s22, 1
      %p192 = por %p190, %p191
      %p193 = scmp.ne.s32.totalorder %s182, %s183
      %p194 = scmp.eq.s32.totalorder %s22, 0
      %p195 = por %p193, %p194
      %p196 = scmp.ne.s32.totalorder %s182, %s183
      %p197 = scmp.eq.s32.totalorder %s23, 1
      %p198 = por %p196, %p197
      %p200 = scmp.ne.s32.totalorder %s183, %s199
      %p201 = scmp.eq.s32.totalorder %s23, 0
      %p202 = por %p200, %p201
      %p203 = scmp.le.s32.totalorder 1, %s17
      %p204 = scmp.lt.s32.totalorder %s17, 3
      %p205 = pnand %p203, %p204
      %p206 = pneg %p205
      // Predicated region
      $region9: #{encoder_forward.1} parent=5 // pred_check
        _
      $region10: #{encoder_forward.1} parent=5 // pred_check_branch
        %208 = sbr.rel (%p205) target = $region12
      $region11: #{encoder_forward.1} parent=5 // pred_region
        %s209 = ssub.s32 %s17, 1
        // Predicated region
        $region13: #{encoder_forward.1} parent=11 // pred_check
          %p210 = pneg %p64
        $region14: #{encoder_forward.1} parent=11 // pred_check_branch
          %212 = sbr.rel (%p210) target = $region16
        $region15: #{encoder_forward.1} parent=11 // pred_region
          _
        $region16: #{encoder_forward.1} parent=11 // pred_fallthru
          _
        // Predicated region
        $region17: #{encoder_forward.1} parent=11 // pred_check
          %p213 = pneg %p85
        $region18: #{encoder_forward.1} parent=11 // pred_check_branch
          %215 = sbr.rel (%p213) target = $region20
        $region19: #{encoder_forward.1} parent=11 // pred_region
          _
        $region20: #{encoder_forward.1} parent=11 // pred_fallthru
          _
        // Predicated region
        $region21: #{encoder_forward.1} parent=11 // pred_check
          %p216 = pneg %p106
        $region22: #{encoder_forward.1} parent=11 // pred_check_branch
          %218 = sbr.rel (%p216) target = $region24
        $region23: #{encoder_forward.1} parent=11 // pred_region
          %220 = vsyncadd [#allocation3], 0
          %s221 = sshll.u32 %s3, 4
          %s222 = int_to_ptr.hbm [resolvable:$true] %s221
          %s223 = sshll.u32 [#allocation2], 4
          %s224 = int_to_ptr.vmem [resolvable:$true] %s223
          %229 = dma.hbm_to_vmem [thread:$0]  %s222, 21504, %s224, [#allocation3], 128, 128, 8
        $region24: #{encoder_forward.1} parent=11 // pred_fallthru
          _
        // Predicated region
        $region25: #{encoder_forward.1} parent=11 // pred_check
          %p230 = pneg %p127
        $region26: #{encoder_forward.1} parent=11 // pred_check_branch
          %232 = sbr.rel (%p230) target = $region28
        $region27: #{encoder_forward.1} parent=11 // pred_region
          _
        $region28: #{encoder_forward.1} parent=11 // pred_fallthru
          _
        // Predicated region
        $region29: #{encoder_forward.1} parent=11 // pred_check
          %p233 = pneg %p148
        $region30: #{encoder_forward.1} parent=11 // pred_check_branch
          %235 = sbr.rel (%p233) target = $region32
        $region31: #{encoder_forward.1} parent=11 // pred_region
          _
        $region32: #{encoder_forward.1} parent=11 // pred_fallthru
          _
        // Predicated region
        $region33: #{encoder_forward.1} parent=11 // pred_check
          %p236 = pneg %p169
        $region34: #{encoder_forward.1} parent=11 // pred_check_branch
          %238 = sbr.rel (%p236) target = $region36
        $region35: #{encoder_forward.1} parent=11 // pred_region
          _
        $region36: #{encoder_forward.1} parent=11 // pred_fallthru
          _
      $region12: #{encoder_forward.1} parent=5 // pred_fallthru
        _
      %p239 = scmp.lt.s32.totalorder %s17, 2
      // Predicated region
      $region37: #{encoder_forward.1} parent=5 // pred_check
        %p240 = pneg %p239
      $region38: #{encoder_forward.1} parent=5 // pred_check_branch
        %242 = sbr.rel (%p240) target = $region40
      $region39: #{encoder_forward.1} parent=5 // pred_region
        // Predicated region
        $region41: #{encoder_forward.1} parent=39 // pred_check
          %p243 = pneg %p37
        $region42: #{encoder_forward.1} parent=39 // pred_check_branch
          %245 = sbr.rel (%p243) target = $region44
        $region43: #{encoder_forward.1} parent=39 // pred_region
          %p246 = scmp.lt.s32.totalorder %s17, 1
          %s247 = scalar_select %p246, %s17, 1
          %s248 = smul.addr %s247, 8
          %s249 = smul.addr %s248, 8
          %s250 = scalar_lea.vmem %s0, %s249
        $region44: #{encoder_forward.1} parent=39 // pred_fallthru
          _
      $region40: #{encoder_forward.1} parent=5 // pred_fallthru
        _
      %p251 = scmp.le.s32.totalorder 1, %s17
      %p252 = scmp.lt.s32.totalorder %s17, 3
      %p253 = pnand %p251, %p252
      %p254 = pneg %p253
      // Predicated region
      $region45: #{encoder_forward.1} parent=5 // pred_check
        _
      $region46: #{encoder_forward.1} parent=5 // pred_check_branch
        %256 = sbr.rel (%p253) target = $region48
      $region47: #{encoder_forward.1} parent=5 // pred_region
        %s257 = ssub.s32 %s17, 1
        // Predicated region
        $region49: #{encoder_forward.1} parent=47 // pred_check
          %p258 = pneg %p106
        $region50: #{encoder_forward.1} parent=47 // pred_check_branch
          %260 = sbr.rel (%p258) target = $region52
        $region51: #{encoder_forward.1} parent=47 // pred_region
          %262 = dma.done [#allocation3], 21504
        $region52: #{encoder_forward.1} parent=47 // pred_fallthru
          _
        %p263 = scmp.lt.s32.totalorder %s22, 1
        %s264 = scalar_select %p263, %s22, 1
        %s265 = smul.addr %s264, 8
        %s266 = smul.addr %s265, 8
        %s267 = scalar_lea.vmem %s0, %s266
        %p268 = pneg %p43
        %p269 = pneg %p40
        %p270 = pneg %p64
        %p271 = pneg %p61
        %p272 = pneg %p85
        %p273 = pneg %p82
        %p274 = pneg %p106
        %p275 = pneg %p103
        %p276 = pneg %p127
        %p277 = pneg %p124
        %p278 = pneg %p148
        %p279 = pneg %p145
        %p280 = pneg %p169
        %p281 = pneg %p166
        %p282 = pneg %p195
        %p283 = pneg %p192
        %s284 = sand.u32 %s182, 1
        %s285 = scalar_lea.sflag [#allocation4], %s284
        %s286 = sand.u32 %s182, 1
        %s287 = smul.addr %s286, 64
        %s288 = scalar_lea.vmem [#allocation5], %s287
        %p289 = scmp.lt.s32.totalorder %s22, 1
        %s290 = scalar_select %p289, %s22, 1
        %s291 = smul.addr %s290, 8
        %s292 = smul.addr %s291, 8
        %s293 = scalar_lea.vmem %s0, %s292
        %v294 = vld [vmem:[%s293] sm:$0xff]
        %v295 = vld [vmem:[%s293 + $0x8] sm:$0xff]
        %v296 = vld [vmem:[%s293 + $0x10] sm:$0xff]
        %v297 = vld [vmem:[%s293 + $0x18] sm:$0xff]
        %v298 = vld [vmem:[%s293 + $0x20] sm:$0xff]
        %v299 = vld [vmem:[%s293 + $0x28] sm:$0xff]
        %v300 = vld [vmem:[%s293 + $0x30] sm:$0xff]
        %v301 = vld [vmem:[%s293 + $0x38] sm:$0xff]
        %v302 = vld [vmem:[%s1] sm:$0xff]
        %v303 = vld [vmem:[%s1 + $0x8] sm:$0xff]
        %v304 = vld [vmem:[%s1 + $0x10] sm:$0xff]
        %v305 = vld [vmem:[%s1 + $0x18] sm:$0xff]
        %v306 = vld [vmem:[%s1 + $0x20] sm:$0xff]
        %v307 = vld [vmem:[%s1 + $0x28] sm:$0xff]
        %v308 = vld [vmem:[%s1 + $0x30] sm:$0xff]
        %v309 = vld [vmem:[%s1 + $0x38] sm:$0xff]
        %v310 = vld [vmem:[%s1 + $0x40] sm:$0xff]
        %v311 = vld [vmem:[%s1 + $0x48] sm:$0xff]
        %v312 = vld [vmem:[%s1 + $0x50] sm:$0xff]
        %v313 = vld [vmem:[%s1 + $0x58] sm:$0xff]
        %v314 = vld [vmem:[%s1 + $0x60] sm:$0xff]
        %v315 = vld [vmem:[%s1 + $0x68] sm:$0xff]
        %v316 = vld [vmem:[%s2] sm:$0xff]
        %v317 = vld [vmem:[%s2 + $0x8] sm:$0xff]
        %v318 = vld [vmem:[%s2 + $0x10] sm:$0xff]
        %v319 = vld [vmem:[%s2 + $0x18] sm:$0xff]
        %v320 = vld [vmem:[%s2 + $0x20] sm:$0xff]
        %v321 = vld [vmem:[%s2 + $0x28] sm:$0xff]
        %v322 = vld [vmem:[%s2 + $0x30] sm:$0xff]
        %v323 = vld [vmem:[%s2 + $0x38] sm:$0xff]
        %v324 = vld [vmem:[%s2 + $0x40] sm:$0xff]
        %v325 = vld [vmem:[%s2 + $0x48] sm:$0xff]
        %v326 = vld [vmem:[%s2 + $0x50] sm:$0xff]
        %v327 = vld [vmem:[%s2 + $0x58] sm:$0xff]
        %v328 = vld [vmem:[%s2 + $0x60] sm:$0xff]
        %v329 = vld [vmem:[%s2 + $0x68] sm:$0xff]
        %331 = vset.pattern.permute.xlu0 0
        %332 = vperm.xlu0 %331, %v316
        %v333 = vpop.permute.xlu0 %332
        %336 = vset.pattern.permute.xlu0 0
        %337 = vperm.xlu0 %336, %v317
        %v338 = vpop.permute.xlu0 %337
        %341 = vset.pattern.permute.xlu0 0
        %342 = vperm.xlu0 %341, %v318
        %v343 = vpop.permute.xlu0 %342
        %346 = vset.pattern.permute.xlu0 0
        %347 = vperm.xlu0 %346, %v319
        %v348 = vpop.permute.xlu0 %347
        %351 = vset.pattern.permute.xlu0 0
        %352 = vperm.xlu0 %351, %v320
        %v353 = vpop.permute.xlu0 %352
        %356 = vset.pattern.permute.xlu0 0
        %357 = vperm.xlu0 %356, %v321
        %v358 = vpop.permute.xlu0 %357
        %361 = vset.pattern.permute.xlu0 0
        %362 = vperm.xlu0 %361, %v322
        %v363 = vpop.permute.xlu0 %362
        %366 = vset.pattern.permute.xlu0 0
        %367 = vperm.xlu0 %366, %v323
        %v368 = vpop.permute.xlu0 %367
        %371 = vset.pattern.permute.xlu0 0
        %372 = vperm.xlu0 %371, %v324
        %v373 = vpop.permute.xlu0 %372
        %376 = vset.pattern.permute.xlu0 0
        %377 = vperm.xlu0 %376, %v325
        %v378 = vpop.permute.xlu0 %377
        %381 = vset.pattern.permute.xlu0 0
        %382 = vperm.xlu0 %381, %v326
        %v383 = vpop.permute.xlu0 %382
        %386 = vset.pattern.permute.xlu0 0
        %387 = vperm.xlu0 %386, %v327
        %v388 = vpop.permute.xlu0 %387
        %391 = vset.pattern.permute.xlu0 0
        %392 = vperm.xlu0 %391, %v328
        %v393 = vpop.permute.xlu0 %392
        %396 = vset.pattern.permute.xlu0 0
        %397 = vperm.xlu0 %396, %v329
        %v398 = vpop.permute.xlu0 %397
        %vm400 = vcmask 523264
        %v402 = vsel %vm400, %v302, 0
        %v405 = vsel %vm400, %v303, 0
        %v408 = vsel %vm400, %v304, 0
        %v411 = vsel %vm400, %v305, 0
        %v414 = vsel %vm400, %v306, 0
        %v417 = vsel %vm400, %v307, 0
        %v420 = vsel %vm400, %v308, 0
        %v423 = vsel %vm400, %v309, 0
        %v426 = vsel %vm400, %v310, 0
        %v429 = vsel %vm400, %v311, 0
        %v432 = vsel %vm400, %v312, 0
        %v435 = vsel %vm400, %v313, 0
        %v438 = vsel %vm400, %v314, 0
        %v441 = vsel %vm400, %v315, 0
        %443 = vmatpush.msra.mxu0 0.0
        %444 = vmatpush.msra.mxu0 0.0
        %445 = vmatpush.msra.mxu0 0.0
        %446 = vmatpush.msra.mxu0 0.0
        %447 = vmatpush.msra.mxu0 0.0
        %448 = vmatpush.msra.mxu0 0.0
        %449 = vmatpush.msra.mxu0 0.0
        %450 = vmatpush.msra.mxu0 0.0
        %451 = vmatpush.msra.mxu0 %v301
        %452 = vmatpush.msra.mxu0 %v300
        %453 = vmatpush.msra.mxu0 %v299
        %454 = vmatpush.msra.mxu0 %v298
        %455 = vmatpush.msra.mxu0 %v297
        %456 = vmatpush.msra.mxu0 %v296
        %457 = vmatpush.msra.mxu0 %v295
        %458 = vmatpush.msra.mxu0 %v294
        %459 = vmatmul.f32.gmra.mxu0 %v402
        %v460 = vpop.f32.mrf.mxu0
        %v461 = vadd.f32 %v333, %v460
        %462 = vmatmul.f32.gmra.mxu0 %v405
        %v463 = vpop.f32.mrf.mxu0
        %v464 = vadd.f32 %v338, %v463
        %465 = vmatmul.f32.gmra.mxu0 %v408
        %v466 = vpop.f32.mrf.mxu0
        %v467 = vadd.f32 %v343, %v466
        %468 = vmatmul.f32.gmra.mxu0 %v411
        %v469 = vpop.f32.mrf.mxu0
        %v470 = vadd.f32 %v348, %v469
        %471 = vmatmul.f32.gmra.mxu0 %v414
        %v472 = vpop.f32.mrf.mxu0
        %v473 = vadd.f32 %v353, %v472
        %474 = vmatmul.f32.gmra.mxu0 %v417
        %v475 = vpop.f32.mrf.mxu0
        %v476 = vadd.f32 %v358, %v475
        %477 = vmatmul.f32.gmra.mxu0 %v420
        %v478 = vpop.f32.mrf.mxu0
        %v479 = vadd.f32 %v363, %v478
        %480 = vmatmul.f32.gmra.mxu0 %v423
        %v481 = vpop.f32.mrf.mxu0
        %v482 = vadd.f32 %v368, %v481
        %483 = vmatmul.f32.gmra.mxu0 %v426
        %v484 = vpop.f32.mrf.mxu0
        %v485 = vadd.f32 %v373, %v484
        %486 = vmatmul.f32.gmra.mxu0 %v429
        %v487 = vpop.f32.mrf.mxu0
        %v488 = vadd.f32 %v378, %v487
        %489 = vmatmul.f32.gmra.mxu0 %v432
        %v490 = vpop.f32.mrf.mxu0
        %v491 = vadd.f32 %v383, %v490
        %492 = vmatmul.f32.gmra.mxu0 %v435
        %v493 = vpop.f32.mrf.mxu0
        %v494 = vadd.f32 %v388, %v493
        %495 = vmatmul.f32.gmra.mxu0 %v438
        %v496 = vpop.f32.mrf.mxu0
        %v497 = vadd.f32 %v393, %v496
        %498 = vmatmul.f32.gmra.mxu0 %v441
        %v499 = vpop.f32.mrf.mxu0
        %v500 = vadd.f32 %v398, %v499
        %501 = vdwg.mxu0
        %v502 = vlaneseq
        %v503 = vand.u32 %v502, 127
        %vm504 = vcmp.eq.s32.totalorder %v503, 0
        %vm505 = vcmp.eq.s32.totalorder %v503, 127
        %506 = vrot.lane.b32.xlu0 %v461, 1
        %v507 = vpop.permute.xlu0 %506
        %508 = vrot.lane.b32.xlu0 %v464, 1
        %v509 = vpop.permute.xlu0 %508
        %510 = vrot.lane.b32.xlu0 %v467, 1
        %v511 = vpop.permute.xlu0 %510
        %512 = vrot.lane.b32.xlu0 %v470, 1
        %v513 = vpop.permute.xlu0 %512
        %514 = vrot.lane.b32.xlu0 %v473, 1
        %v515 = vpop.permute.xlu0 %514
        %516 = vrot.lane.b32.xlu0 %v476, 1
        %v517 = vpop.permute.xlu0 %516
        %518 = vrot.lane.b32.xlu0 %v479, 1
        %v519 = vpop.permute.xlu0 %518
        %520 = vrot.lane.b32.xlu0 %v482, 1
        %v521 = vpop.permute.xlu0 %520
        %522 = vrot.lane.b32.xlu0 %v485, 1
        %v523 = vpop.permute.xlu0 %522
        %524 = vrot.lane.b32.xlu0 %v488, 1
        %v525 = vpop.permute.xlu0 %524
        %526 = vrot.lane.b32.xlu0 %v491, 1
        %v527 = vpop.permute.xlu0 %526
        %528 = vrot.lane.b32.xlu0 %v494, 1
        %v529 = vpop.permute.xlu0 %528
        %530 = vrot.lane.b32.xlu0 %v497, 1
        %v531 = vpop.permute.xlu0 %530
        %532 = vrot.lane.b32.xlu0 %v500, 1
        %v533 = vpop.permute.xlu0 %532
        %v534 = vsel %vm504, 0.0, %v507
        %v535 = vsel %vm504, 0.0, %v509
        %v536 = vsel %vm504, 0.0, %v511
        %v537 = vsel %vm504, 0.0, %v513
        %v538 = vsel %vm504, 0.0, %v515
        %v539 = vsel %vm504, 0.0, %v517
        %v540 = vsel %vm504, 0.0, %v519
        %v541 = vsel %vm504, 0.0, %v521
        %v542 = vsel %vm504, 0.0, %v523
        %v543 = vsel %vm504, 0.0, %v525
        %v544 = vsel %vm504, 0.0, %v527
        %v545 = vsel %vm504, 0.0, %v529
        %v546 = vsel %vm504, 0.0, %v531
        %v547 = vsel %vm504, 0.0, %v533
        %548 = vrot.lane.b32.xlu0 %v461, 127
        %v549 = vpop.permute.xlu0 %548
        %550 = vrot.lane.b32.xlu0 %v464, 127
        %v551 = vpop.permute.xlu0 %550
        %552 = vrot.lane.b32.xlu0 %v467, 127
        %v553 = vpop.permute.xlu0 %552
        %554 = vrot.lane.b32.xlu0 %v470, 127
        %v555 = vpop.permute.xlu0 %554
        %556 = vrot.lane.b32.xlu0 %v473, 127
        %v557 = vpop.permute.xlu0 %556
        %558 = vrot.lane.b32.xlu0 %v476, 127
        %v559 = vpop.permute.xlu0 %558
        %560 = vrot.lane.b32.xlu0 %v479, 127
        %v561 = vpop.permute.xlu0 %560
        %562 = vrot.lane.b32.xlu0 %v482, 127
        %v563 = vpop.permute.xlu0 %562
        %564 = vrot.lane.b32.xlu0 %v485, 127
        %v565 = vpop.permute.xlu0 %564
        %566 = vrot.lane.b32.xlu0 %v488, 127
        %v567 = vpop.permute.xlu0 %566
        %568 = vrot.lane.b32.xlu0 %v491, 127
        %v569 = vpop.permute.xlu0 %568
        %570 = vrot.lane.b32.xlu0 %v494, 127
        %v571 = vpop.permute.xlu0 %570
        %572 = vrot.lane.b32.xlu0 %v497, 127
        %v573 = vpop.permute.xlu0 %572
        %574 = vrot.lane.b32.xlu0 %v500, 127
        %v575 = vpop.permute.xlu0 %574
        %v576 = vsel %vm505, 0.0, %v549
        %v577 = vsel %vm505, 0.0, %v551
        %v578 = vsel %vm505, 0.0, %v553
        %v579 = vsel %vm505, 0.0, %v555
        %v580 = vsel %vm505, 0.0, %v557
        %v581 = vsel %vm505, 0.0, %v559
        %v582 = vsel %vm505, 0.0, %v561
        %v583 = vsel %vm505, 0.0, %v563
        %v584 = vsel %vm505, 0.0, %v565
        %v585 = vsel %vm505, 0.0, %v567
        %v586 = vsel %vm505, 0.0, %v569
        %v587 = vsel %vm505, 0.0, %v571
        %v588 = vsel %vm505, 0.0, %v573
        %v589 = vsel %vm505, 0.0, %v575
        %v590 = vld [vmem:[#allocation2] sm:$0xff]
        %v591 = vld [vmem:[#allocation2 + $0x8] sm:$0xff]
        %v592 = vld [vmem:[#allocation2 + $0x10] sm:$0xff]
        %v593 = vld [vmem:[#allocation2 + $0x18] sm:$0xff]
        %v594 = vld [vmem:[#allocation2 + $0x20] sm:$0xff]
        %v595 = vld [vmem:[#allocation2 + $0x28] sm:$0xff]
        %v596 = vld [vmem:[#allocation2 + $0x30] sm:$0xff]
        %v597 = vld [vmem:[#allocation2 + $0x38] sm:$0xff]
        %v598 = vld [vmem:[#allocation2 + $0x40] sm:$0xff]
        %v599 = vld [vmem:[#allocation2 + $0x48] sm:$0xff]
        %v600 = vld [vmem:[#allocation2 + $0x50] sm:$0xff]
        %v601 = vld [vmem:[#allocation2 + $0x58] sm:$0xff]
        %v602 = vld [vmem:[#allocation2 + $0x60] sm:$0xff]
        %v603 = vld [vmem:[#allocation2 + $0x68] sm:$0xff]
        %s604 = scalar_lea.vmem [#allocation2], 112
        %v605 = vld [vmem:[%s604] sm:$0xff]
        %v606 = vld [vmem:[%s604 + $0x8] sm:$0xff]
        %v607 = vld [vmem:[%s604 + $0x10] sm:$0xff]
        %v608 = vld [vmem:[%s604 + $0x18] sm:$0xff]
        %v609 = vld [vmem:[%s604 + $0x20] sm:$0xff]
        %v610 = vld [vmem:[%s604 + $0x28] sm:$0xff]
        %v611 = vld [vmem:[%s604 + $0x30] sm:$0xff]
        %v612 = vld [vmem:[%s604 + $0x38] sm:$0xff]
        %v613 = vld [vmem:[%s604 + $0x40] sm:$0xff]
        %v614 = vld [vmem:[%s604 + $0x48] sm:$0xff]
        %v615 = vld [vmem:[%s604 + $0x50] sm:$0xff]
        %v616 = vld [vmem:[%s604 + $0x58] sm:$0xff]
        %v617 = vld [vmem:[%s604 + $0x60] sm:$0xff]
        %v618 = vld [vmem:[%s604 + $0x68] sm:$0xff]
        %vm619 = vcmask 916480
        %v621 = vsel %vm619, %v605, 0
        %v624 = vsel %vm619, %v606, 0
        %v627 = vsel %vm619, %v607, 0
        %v630 = vsel %vm619, %v608, 0
        %v633 = vsel %vm619, %v609, 0
        %v636 = vsel %vm619, %v610, 0
        %v639 = vsel %vm619, %v611, 0
        %v642 = vsel %vm619, %v612, 0
        %v645 = vsel %vm619, %v613, 0
        %v648 = vsel %vm619, %v614, 0
        %v651 = vsel %vm619, %v615, 0
        %v654 = vsel %vm619, %v616, 0
        %v657 = vsel %vm619, %v617, 0
        %v660 = vsel %vm619, %v618, 0
        %662 = vmatpush.msra.mxu0 0.0
        %663 = vmatpush.msra.mxu0 0.0
        %664 = vmatpush.msra.mxu0 %v500
        %665 = vmatpush.msra.mxu0 %v497
        %666 = vmatpush.msra.mxu0 %v494
        %667 = vmatpush.msra.mxu0 %v491
        %668 = vmatpush.msra.mxu0 %v488
        %669 = vmatpush.msra.mxu0 %v485
        %670 = vmatpush.msra.mxu0 %v482
        %671 = vmatpush.msra.mxu0 %v479
        %672 = vmatpush.msra.mxu0 %v476
        %673 = vmatpush.msra.mxu0 %v473
        %674 = vmatpush.msra.mxu0 %v470
        %675 = vmatpush.msra.mxu0 %v467
        %676 = vmatpush.msra.mxu0 %v464
        %677 = vmatpush.msra.mxu0 %v461
        %678 = vmatmul.f32.gmra.mxu0 %v621
        %v679 = vpop.f32.mrf.mxu0
        %v680 = vadd.f32 0.0, %v679
        %681 = vmatmul.f32.gmra.mxu0 %v624
        %v682 = vpop.f32.mrf.mxu0
        %v683 = vadd.f32 0.0, %v682
        %684 = vmatmul.f32.gmra.mxu0 %v627
        %v685 = vpop.f32.mrf.mxu0
        %v686 = vadd.f32 0.0, %v685
        %687 = vmatmul.f32.gmra.mxu0 %v630
        %v688 = vpop.f32.mrf.mxu0
        %v689 = vadd.f32 0.0, %v688
        %690 = vmatmul.f32.gmra.mxu0 %v633
        %v691 = vpop.f32.mrf.mxu0
        %v692 = vadd.f32 0.0, %v691
        %693 = vmatmul.f32.gmra.mxu0 %v636
        %v694 = vpop.f32.mrf.mxu0
        %v695 = vadd.f32 0.0, %v694
        %696 = vmatmul.f32.gmra.mxu0 %v639
        %v697 = vpop.f32.mrf.mxu0
        %v698 = vadd.f32 0.0, %v697
        %699 = vmatmul.f32.gmra.mxu0 %v642
        %v700 = vpop.f32.mrf.mxu0
        %v701 = vadd.f32 0.0, %v700
        %702 = vmatmul.f32.gmra.mxu0 %v645
        %v703 = vpop.f32.mrf.mxu0
        %v704 = vadd.f32 0.0, %v703
        %705 = vmatmul.f32.gmra.mxu0 %v648
        %v706 = vpop.f32.mrf.mxu0
        %v707 = vadd.f32 0.0, %v706
        %708 = vmatmul.f32.gmra.mxu0 %v651
        %v709 = vpop.f32.mrf.mxu0
        %v710 = vadd.f32 0.0, %v709
        %711 = vmatmul.f32.gmra.mxu0 %v654
        %v712 = vpop.f32.mrf.mxu0
        %v713 = vadd.f32 0.0, %v712
        %714 = vmatmul.f32.gmra.mxu0 %v657
        %v715 = vpop.f32.mrf.mxu0
        %v716 = vadd.f32 0.0, %v715
        %717 = vmatmul.f32.gmra.mxu0 %v660
        %v718 = vpop.f32.mrf.mxu0
        %v719 = vadd.f32 0.0, %v718
        %720 = vdwg.mxu0
        %v722 = vsel %vm619, %v590, 0
        %v725 = vsel %vm619, %v591, 0
        %v728 = vsel %vm619, %v592, 0
        %v731 = vsel %vm619, %v593, 0
        %v734 = vsel %vm619, %v594, 0
        %v737 = vsel %vm619, %v595, 0
        %v740 = vsel %vm619, %v596, 0
        %v743 = vsel %vm619, %v597, 0
        %v746 = vsel %vm619, %v598, 0
        %v749 = vsel %vm619, %v599, 0
        %v752 = vsel %vm619, %v600, 0
        %v755 = vsel %vm619, %v601, 0
        %v758 = vsel %vm619, %v602, 0
        %v761 = vsel %vm619, %v603, 0
        %763 = vmatpush.msra.mxu0 0.0
        %764 = vmatpush.msra.mxu0 0.0
        %765 = vmatpush.msra.mxu0 %v547
        %766 = vmatpush.msra.mxu0 %v546
        %767 = vmatpush.msra.mxu0 %v545
        %768 = vmatpush.msra.mxu0 %v544
        %769 = vmatpush.msra.mxu0 %v543
        %770 = vmatpush.msra.mxu0 %v542
        %771 = vmatpush.msra.mxu0 %v541
        %772 = vmatpush.msra.mxu0 %v540
        %773 = vmatpush.msra.mxu0 %v539
        %774 = vmatpush.msra.mxu0 %v538
        %775 = vmatpush.msra.mxu0 %v537
        %776 = vmatpush.msra.mxu0 %v536
        %777 = vmatpush.msra.mxu0 %v535
        %778 = vmatpush.msra.mxu0 %v534
        %779 = vmatmul.f32.gmra.mxu0 %v722
        %v780 = vpop.f32.mrf.mxu0
        %v781 = vadd.f32 %v680, %v780
        %782 = vmatmul.f32.gmra.mxu0 %v725
        %v783 = vpop.f32.mrf.mxu0
        %v784 = vadd.f32 %v683, %v783
        %785 = vmatmul.f32.gmra.mxu0 %v728
        %v786 = vpop.f32.mrf.mxu0
        %v787 = vadd.f32 %v686, %v786
        %788 = vmatmul.f32.gmra.mxu0 %v731
        %v789 = vpop.f32.mrf.mxu0
        %v790 = vadd.f32 %v689, %v789
        %791 = vmatmul.f32.gmra.mxu0 %v734
        %v792 = vpop.f32.mrf.mxu0
        %v793 = vadd.f32 %v692, %v792
        %794 = vmatmul.f32.gmra.mxu0 %v737
        %v795 = vpop.f32.mrf.mxu0
        %v796 = vadd.f32 %v695, %v795
        %797 = vmatmul.f32.gmra.mxu0 %v740
        %v798 = vpop.f32.mrf.mxu0
        %v799 = vadd.f32 %v698, %v798
        %800 = vmatmul.f32.gmra.mxu0 %v743
        %v801 = vpop.f32.mrf.mxu0
        %v802 = vadd.f32 %v701, %v801
        %803 = vmatmul.f32.gmra.mxu0 %v746
        %v804 = vpop.f32.mrf.mxu0
        %v805 = vadd.f32 %v704, %v804
        %806 = vmatmul.f32.gmra.mxu0 %v749
        %v807 = vpop.f32.mrf.mxu0
        %v808 = vadd.f32 %v707, %v807
        %809 = vmatmul.f32.gmra.mxu0 %v752
        %v810 = vpop.f32.mrf.mxu0
        %v811 = vadd.f32 %v710, %v810
        %812 = vmatmul.f32.gmra.mxu0 %v755
        %v813 = vpop.f32.mrf.mxu0
        %v814 = vadd.f32 %v713, %v813
        %815 = vmatmul.f32.gmra.mxu0 %v758
        %v816 = vpop.f32.mrf.mxu0
        %v817 = vadd.f32 %v716, %v816
        %818 = vmatmul.f32.gmra.mxu0 %v761
        %v819 = vpop.f32.mrf.mxu0
        %v820 = vadd.f32 %v719, %v819
        %821 = vdwg.mxu0
        %s822 = scalar_lea.vmem [#allocation2], 224
        %v823 = vld [vmem:[%s822] sm:$0xff]
        %v824 = vld [vmem:[%s822 + $0x8] sm:$0xff]
        %v825 = vld [vmem:[%s822 + $0x10] sm:$0xff]
        %v826 = vld [vmem:[%s822 + $0x18] sm:$0xff]
        %v827 = vld [vmem:[%s822 + $0x20] sm:$0xff]
        %v828 = vld [vmem:[%s822 + $0x28] sm:$0xff]
        %v829 = vld [vmem:[%s822 + $0x30] sm:$0xff]
        %v830 = vld [vmem:[%s822 + $0x38] sm:$0xff]
        %v831 = vld [vmem:[%s822 + $0x40] sm:$0xff]
        %v832 = vld [vmem:[%s822 + $0x48] sm:$0xff]
        %v833 = vld [vmem:[%s822 + $0x50] sm:$0xff]
        %v834 = vld [vmem:[%s822 + $0x58] sm:$0xff]
        %v835 = vld [vmem:[%s822 + $0x60] sm:$0xff]
        %v836 = vld [vmem:[%s822 + $0x68] sm:$0xff]
        %v838 = vsel %vm619, %v823, 0
        %v841 = vsel %vm619, %v824, 0
        %v844 = vsel %vm619, %v825, 0
        %v847 = vsel %vm619, %v826, 0
        %v850 = vsel %vm619, %v827, 0
        %v853 = vsel %vm619, %v828, 0
        %v856 = vsel %vm619, %v829, 0
        %v859 = vsel %vm619, %v830, 0
        %v862 = vsel %vm619, %v831, 0
        %v865 = vsel %vm619, %v832, 0
        %v868 = vsel %vm619, %v833, 0
        %v871 = vsel %vm619, %v834, 0
        %v874 = vsel %vm619, %v835, 0
        %v877 = vsel %vm619, %v836, 0
        %879 = vmatpush.msra.mxu0 0.0
        %880 = vmatpush.msra.mxu0 0.0
        %881 = vmatpush.msra.mxu0 %v589
        %882 = vmatpush.msra.mxu0 %v588
        %883 = vmatpush.msra.mxu0 %v587
        %884 = vmatpush.msra.mxu0 %v586
        %885 = vmatpush.msra.mxu0 %v585
        %886 = vmatpush.msra.mxu0 %v584
        %887 = vmatpush.msra.mxu0 %v583
        %888 = vmatpush.msra.mxu0 %v582
        %889 = vmatpush.msra.mxu0 %v581
        %890 = vmatpush.msra.mxu0 %v580
        %891 = vmatpush.msra.mxu0 %v579
        %892 = vmatpush.msra.mxu0 %v578
        %893 = vmatpush.msra.mxu0 %v577
        %894 = vmatpush.msra.mxu0 %v576
        %895 = vmatmul.f32.gmra.mxu0 %v838
        %v896 = vpop.f32.mrf.mxu0
        %v897 = vadd.f32 0.0, %v896
        %898 = vmatmul.f32.gmra.mxu0 %v841
        %v899 = vpop.f32.mrf.mxu0
        %v900 = vadd.f32 0.0, %v899
        %901 = vmatmul.f32.gmra.mxu0 %v844
        %v902 = vpop.f32.mrf.mxu0
        %v903 = vadd.f32 0.0, %v902
        %904 = vmatmul.f32.gmra.mxu0 %v847
        %v905 = vpop.f32.mrf.mxu0
        %v906 = vadd.f32 0.0, %v905
        %907 = vmatmul.f32.gmra.mxu0 %v850
        %v908 = vpop.f32.mrf.mxu0
        %v909 = vadd.f32 0.0, %v908
        %910 = vmatmul.f32.gmra.mxu0 %v853
        %v911 = vpop.f32.mrf.mxu0
        %v912 = vadd.f32 0.0, %v911
        %913 = vmatmul.f32.gmra.mxu0 %v856
        %v914 = vpop.f32.mrf.mxu0
        %v915 = vadd.f32 0.0, %v914
        %916 = vmatmul.f32.gmra.mxu0 %v859
        %v917 = vpop.f32.mrf.mxu0
        %v918 = vadd.f32 0.0, %v917
        %919 = vmatmul.f32.gmra.mxu0 %v862
        %v920 = vpop.f32.mrf.mxu0
        %v921 = vadd.f32 0.0, %v920
        %922 = vmatmul.f32.gmra.mxu0 %v865
        %v923 = vpop.f32.mrf.mxu0
        %v924 = vadd.f32 0.0, %v923
        %925 = vmatmul.f32.gmra.mxu0 %v868
        %v926 = vpop.f32.mrf.mxu0
        %v927 = vadd.f32 0.0, %v926
        %928 = vmatmul.f32.gmra.mxu0 %v871
        %v929 = vpop.f32.mrf.mxu0
        %v930 = vadd.f32 0.0, %v929
        %931 = vmatmul.f32.gmra.mxu0 %v874
        %v932 = vpop.f32.mrf.mxu0
        %v933 = vadd.f32 0.0, %v932
        %934 = vmatmul.f32.gmra.mxu0 %v877
        %v935 = vpop.f32.mrf.mxu0
        %v936 = vadd.f32 0.0, %v935
        %937 = vdwg.mxu0
        %v938 = vadd.f32 %v781, %v897
        %v939 = vadd.f32 %v784, %v900
        %v940 = vadd.f32 %v787, %v903
        %v941 = vadd.f32 %v790, %v906
        %v942 = vadd.f32 %v793, %v909
        %v943 = vadd.f32 %v796, %v912
        %v944 = vadd.f32 %v799, %v915
        %v945 = vadd.f32 %v802, %v918
        %v946 = vadd.f32 %v805, %v921
        %v947 = vadd.f32 %v808, %v924
        %v948 = vadd.f32 %v811, %v927
        %v949 = vadd.f32 %v814, %v930
        %v950 = vadd.f32 %v817, %v933
        %v951 = vadd.f32 %v820, %v936
        %v952 = vld [vmem:[%s4] sm:$0xff]
        %v953 = vld [vmem:[%s4 + $0x8] sm:$0xff]
        %v954 = vld [vmem:[%s4 + $0x10] sm:$0xff]
        %v955 = vld [vmem:[%s4 + $0x18] sm:$0xff]
        %v956 = vld [vmem:[%s4 + $0x20] sm:$0xff]
        %v957 = vld [vmem:[%s4 + $0x28] sm:$0xff]
        %v958 = vld [vmem:[%s4 + $0x30] sm:$0xff]
        %v959 = vld [vmem:[%s4 + $0x38] sm:$0xff]
        %v960 = vld [vmem:[%s4 + $0x40] sm:$0xff]
        %v961 = vld [vmem:[%s4 + $0x48] sm:$0xff]
        %v962 = vld [vmem:[%s4 + $0x50] sm:$0xff]
        %v963 = vld [vmem:[%s4 + $0x58] sm:$0xff]
        %v964 = vld [vmem:[%s4 + $0x60] sm:$0xff]
        %v965 = vld [vmem:[%s4 + $0x68] sm:$0xff]
        %967 = vset.pattern.permute.xlu0 0
        %968 = vperm.xlu0 %967, %v952
        %v969 = vpop.permute.xlu0 %968
        %972 = vset.pattern.permute.xlu0 0
        %973 = vperm.xlu0 %972, %v953
        %v974 = vpop.permute.xlu0 %973
        %977 = vset.pattern.permute.xlu0 0
        %978 = vperm.xlu0 %977, %v954
        %v979 = vpop.permute.xlu0 %978
        %982 = vset.pattern.permute.xlu0 0
        %983 = vperm.xlu0 %982, %v955
        %v984 = vpop.permute.xlu0 %983
        %987 = vset.pattern.permute.xlu0 0
        %988 = vperm.xlu0 %987, %v956
        %v989 = vpop.permute.xlu0 %988
        %992 = vset.pattern.permute.xlu0 0
        %993 = vperm.xlu0 %992, %v957
        %v994 = vpop.permute.xlu0 %993
        %997 = vset.pattern.permute.xlu0 0
        %998 = vperm.xlu0 %997, %v958
        %v999 = vpop.permute.xlu0 %998
        %1002 = vset.pattern.permute.xlu0 0
        %1003 = vperm.xlu0 %1002, %v959
        %v1004 = vpop.permute.xlu0 %1003
        %1007 = vset.pattern.permute.xlu0 0
        %1008 = vperm.xlu0 %1007, %v960
        %v1009 = vpop.permute.xlu0 %1008
        %1012 = vset.pattern.permute.xlu0 0
        %1013 = vperm.xlu0 %1012, %v961
        %v1014 = vpop.permute.xlu0 %1013
        %1017 = vset.pattern.permute.xlu0 0
        %1018 = vperm.xlu0 %1017, %v962
        %v1019 = vpop.permute.xlu0 %1018
        %1022 = vset.pattern.permute.xlu0 0
        %1023 = vperm.xlu0 %1022, %v963
        %v1024 = vpop.permute.xlu0 %1023
        %1027 = vset.pattern.permute.xlu0 0
        %1028 = vperm.xlu0 %1027, %v964
        %v1029 = vpop.permute.xlu0 %1028
        %1032 = vset.pattern.permute.xlu0 0
        %1033 = vperm.xlu0 %1032, %v965
        %v1034 = vpop.permute.xlu0 %1033
        %v1036 = vadd.f32 %v938, %v969
        %v1037 = vadd.f32 %v939, %v974
        %v1038 = vadd.f32 %v940, %v979
        %v1039 = vadd.f32 %v941, %v984
        %v1040 = vadd.f32 %v942, %v989
        %v1041 = vadd.f32 %v943, %v994
        %v1042 = vadd.f32 %v944, %v999
        %v1043 = vadd.f32 %v945, %v1004
        %v1044 = vadd.f32 %v946, %v1009
        %v1045 = vadd.f32 %v947, %v1014
        %v1046 = vadd.f32 %v948, %v1019
        %v1047 = vadd.f32 %v949, %v1024
        %v1048 = vadd.f32 %v950, %v1029
        %v1049 = vadd.f32 %v951, %v1034
        %v1050 = vmax.f32 %v1036, 0.0
        %v1051 = vmax.f32 %v1037, 0.0
        %v1052 = vmax.f32 %v1038, 0.0
        %v1053 = vmax.f32 %v1039, 0.0
        %v1054 = vmax.f32 %v1040, 0.0
        %v1055 = vmax.f32 %v1041, 0.0
        %v1056 = vmax.f32 %v1042, 0.0
        %v1057 = vmax.f32 %v1043, 0.0
        %v1058 = vmax.f32 %v1044, 0.0
        %v1059 = vmax.f32 %v1045, 0.0
        %v1060 = vmax.f32 %v1046, 0.0
        %v1061 = vmax.f32 %v1047, 0.0
        %v1062 = vmax.f32 %v1048, 0.0
        %v1063 = vmax.f32 %v1049, 0.0
        %v1064 = vadd.f32 %v1050, %v461
        %v1065 = vadd.f32 %v1051, %v464
        %v1066 = vadd.f32 %v1052, %v467
        %v1067 = vadd.f32 %v1053, %v470
        %v1068 = vadd.f32 %v1054, %v473
        %v1069 = vadd.f32 %v1055, %v476
        %v1070 = vadd.f32 %v1056, %v479
        %v1071 = vadd.f32 %v1057, %v482
        %v1072 = vadd.f32 %v1058, %v485
        %v1073 = vadd.f32 %v1059, %v488
        %v1074 = vadd.f32 %v1060, %v491
        %v1075 = vadd.f32 %v1061, %v494
        %v1076 = vadd.f32 %v1062, %v497
        %v1077 = vadd.f32 %v1063, %v500
        %1078 = vrot.lane.b32.xlu0 %v1064, 1
        %v1079 = vpop.permute.xlu0 %1078
        %1080 = vrot.lane.b32.xlu0 %v1065, 1
        %v1081 = vpop.permute.xlu0 %1080
        %1082 = vrot.lane.b32.xlu0 %v1066, 1
        %v1083 = vpop.permute.xlu0 %1082
        %1084 = vrot.lane.b32.xlu0 %v1067, 1
        %v1085 = vpop.permute.xlu0 %1084
        %1086 = vrot.lane.b32.xlu0 %v1068, 1
        %v1087 = vpop.permute.xlu0 %1086
        %1088 = vrot.lane.b32.xlu0 %v1069, 1
        %v1089 = vpop.permute.xlu0 %1088
        %1090 = vrot.lane.b32.xlu0 %v1070, 1
        %v1091 = vpop.permute.xlu0 %1090
        %1092 = vrot.lane.b32.xlu0 %v1071, 1
        %v1093 = vpop.permute.xlu0 %1092
        %1094 = vrot.lane.b32.xlu0 %v1072, 1
        %v1095 = vpop.permute.xlu0 %1094
        %1096 = vrot.lane.b32.xlu0 %v1073, 1
        %v1097 = vpop.permute.xlu0 %1096
        %1098 = vrot.lane.b32.xlu0 %v1074, 1
        %v1099 = vpop.permute.xlu0 %1098
        %1100 = vrot.lane.b32.xlu0 %v1075, 1
        %v1101 = vpop.permute.xlu0 %1100
        %1102 = vrot.lane.b32.xlu0 %v1076, 1
        %v1103 = vpop.permute.xlu0 %1102
        %1104 = vrot.lane.b32.xlu0 %v1077, 1
        %v1105 = vpop.permute.xlu0 %1104
        %v1106 = vsel %vm504, 0.0, %v1079
        %v1107 = vsel %vm504, 0.0, %v1081
        %v1108 = vsel %vm504, 0.0, %v1083
        %v1109 = vsel %vm504, 0.0, %v1085
        %v1110 = vsel %vm504, 0.0, %v1087
        %v1111 = vsel %vm504, 0.0, %v1089
        %v1112 = vsel %vm504, 0.0, %v1091
        %v1113 = vsel %vm504, 0.0, %v1093
        %v1114 = vsel %vm504, 0.0, %v1095
        %v1115 = vsel %vm504, 0.0, %v1097
        %v1116 = vsel %vm504, 0.0, %v1099
        %v1117 = vsel %vm504, 0.0, %v1101
        %v1118 = vsel %vm504, 0.0, %v1103
        %v1119 = vsel %vm504, 0.0, %v1105
        %1120 = vrot.lane.b32.xlu0 %v1064, 127
        %v1121 = vpop.permute.xlu0 %1120
        %1122 = vrot.lane.b32.xlu0 %v1065, 127
        %v1123 = vpop.permute.xlu0 %1122
        %1124 = vrot.lane.b32.xlu0 %v1066, 127
        %v1125 = vpop.permute.xlu0 %1124
        %1126 = vrot.lane.b32.xlu0 %v1067, 127
        %v1127 = vpop.permute.xlu0 %1126
        %1128 = vrot.lane.b32.xlu0 %v1068, 127
        %v1129 = vpop.permute.xlu0 %1128
        %1130 = vrot.lane.b32.xlu0 %v1069, 127
        %v1131 = vpop.permute.xlu0 %1130
        %1132 = vrot.lane.b32.xlu0 %v1070, 127
        %v1133 = vpop.permute.xlu0 %1132
        %1134 = vrot.lane.b32.xlu0 %v1071, 127
        %v1135 = vpop.permute.xlu0 %1134
        %1136 = vrot.lane.b32.xlu0 %v1072, 127
        %v1137 = vpop.permute.xlu0 %1136
        %1138 = vrot.lane.b32.xlu0 %v1073, 127
        %v1139 = vpop.permute.xlu0 %1138
        %1140 = vrot.lane.b32.xlu0 %v1074, 127
        %v1141 = vpop.permute.xlu0 %1140
        %1142 = vrot.lane.b32.xlu0 %v1075, 127
        %v1143 = vpop.permute.xlu0 %1142
        %1144 = vrot.lane.b32.xlu0 %v1076, 127
        %v1145 = vpop.permute.xlu0 %1144
        %1146 = vrot.lane.b32.xlu0 %v1077, 127
        %v1147 = vpop.permute.xlu0 %1146
        %v1148 = vsel %vm505, 0.0, %v1121
        %v1149 = vsel %vm505, 0.0, %v1123
        %v1150 = vsel %vm505, 0.0, %v1125
        %v1151 = vsel %vm505, 0.0, %v1127
        %v1152 = vsel %vm505, 0.0, %v1129
        %v1153 = vsel %vm505, 0.0, %v1131
        %v1154 = vsel %vm505, 0.0, %v1133
        %v1155 = vsel %vm505, 0.0, %v1135
        %v1156 = vsel %vm505, 0.0, %v1137
        %v1157 = vsel %vm505, 0.0, %v1139
        %v1158 = vsel %vm505, 0.0, %v1141
        %v1159 = vsel %vm505, 0.0, %v1143
        %v1160 = vsel %vm505, 0.0, %v1145
        %v1161 = vsel %vm505, 0.0, %v1147
        %s1162 = scalar_lea.vmem [#allocation2], 336
        %v1163 = vld [vmem:[%s1162] sm:$0xff]
        %v1164 = vld [vmem:[%s1162 + $0x8] sm:$0xff]
        %v1165 = vld [vmem:[%s1162 + $0x10] sm:$0xff]
        %v1166 = vld [vmem:[%s1162 + $0x18] sm:$0xff]
        %v1167 = vld [vmem:[%s1162 + $0x20] sm:$0xff]
        %v1168 = vld [vmem:[%s1162 + $0x28] sm:$0xff]
        %v1169 = vld [vmem:[%s1162 + $0x30] sm:$0xff]
        %v1170 = vld [vmem:[%s1162 + $0x38] sm:$0xff]
        %v1171 = vld [vmem:[%s1162 + $0x40] sm:$0xff]
        %v1172 = vld [vmem:[%s1162 + $0x48] sm:$0xff]
        %v1173 = vld [vmem:[%s1162 + $0x50] sm:$0xff]
        %v1174 = vld [vmem:[%s1162 + $0x58] sm:$0xff]
        %v1175 = vld [vmem:[%s1162 + $0x60] sm:$0xff]
        %v1176 = vld [vmem:[%s1162 + $0x68] sm:$0xff]
        %s1177 = scalar_lea.vmem [#allocation2], 448
        %v1178 = vld [vmem:[%s1177] sm:$0xff]
        %v1179 = vld [vmem:[%s1177 + $0x8] sm:$0xff]
        %v1180 = vld [vmem:[%s1177 + $0x10] sm:$0xff]
        %v1181 = vld [vmem:[%s1177 + $0x18] sm:$0xff]
        %v1182 = vld [vmem:[%s1177 + $0x20] sm:$0xff]
        %v1183 = vld [vmem:[%s1177 + $0x28] sm:$0xff]
        %v1184 = vld [vmem:[%s1177 + $0x30] sm:$0xff]
        %v1185 = vld [vmem:[%s1177 + $0x38] sm:$0xff]
        %v1186 = vld [vmem:[%s1177 + $0x40] sm:$0xff]
        %v1187 = vld [vmem:[%s1177 + $0x48] sm:$0xff]
        %v1188 = vld [vmem:[%s1177 + $0x50] sm:$0xff]
        %v1189 = vld [vmem:[%s1177 + $0x58] sm:$0xff]
        %v1190 = vld [vmem:[%s1177 + $0x60] sm:$0xff]
        %v1191 = vld [vmem:[%s1177 + $0x68] sm:$0xff]
        %v1193 = vsel %vm619, %v1178, 0
        %v1196 = vsel %vm619, %v1179, 0
        %v1199 = vsel %vm619, %v1180, 0
        %v1202 = vsel %vm619, %v1181, 0
        %v1205 = vsel %vm619, %v1182, 0
        %v1208 = vsel %vm619, %v1183, 0
        %v1211 = vsel %vm619, %v1184, 0
        %v1214 = vsel %vm619, %v1185, 0
        %v1217 = vsel %vm619, %v1186, 0
        %v1220 = vsel %vm619, %v1187, 0
        %v1223 = vsel %vm619, %v1188, 0
        %v1226 = vsel %vm619, %v1189, 0
        %v1229 = vsel %vm619, %v1190, 0
        %v1232 = vsel %vm619, %v1191, 0
        %1234 = vmatpush.msra.mxu0 0.0
        %1235 = vmatpush.msra.mxu0 0.0
        %1236 = vmatpush.msra.mxu0 %v1077
        %1237 = vmatpush.msra.mxu0 %v1076
        %1238 = vmatpush.msra.mxu0 %v1075
        %1239 = vmatpush.msra.mxu0 %v1074
        %1240 = vmatpush.msra.mxu0 %v1073
        %1241 = vmatpush.msra.mxu0 %v1072
        %1242 = vmatpush.msra.mxu0 %v1071
        %1243 = vmatpush.msra.mxu0 %v1070
        %1244 = vmatpush.msra.mxu0 %v1069
        %1245 = vmatpush.msra.mxu0 %v1068
        %1246 = vmatpush.msra.mxu0 %v1067
        %1247 = vmatpush.msra.mxu0 %v1066
        %1248 = vmatpush.msra.mxu0 %v1065
        %1249 = vmatpush.msra.mxu0 %v1064
        %1250 = vmatmul.f32.gmra.mxu0 %v1193
        %v1251 = vpop.f32.mrf.mxu0
        %v1252 = vadd.f32 0.0, %v1251
        %1253 = vmatmul.f32.gmra.mxu0 %v1196
        %v1254 = vpop.f32.mrf.mxu0
        %v1255 = vadd.f32 0.0, %v1254
        %1256 = vmatmul.f32.gmra.mxu0 %v1199
        %v1257 = vpop.f32.mrf.mxu0
        %v1258 = vadd.f32 0.0, %v1257
        %1259 = vmatmul.f32.gmra.mxu0 %v1202
        %v1260 = vpop.f32.mrf.mxu0
        %v1261 = vadd.f32 0.0, %v1260
        %1262 = vmatmul.f32.gmra.mxu0 %v1205
        %v1263 = vpop.f32.mrf.mxu0
        %v1264 = vadd.f32 0.0, %v1263
        %1265 = vmatmul.f32.gmra.mxu0 %v1208
        %v1266 = vpop.f32.mrf.mxu0
        %v1267 = vadd.f32 0.0, %v1266
        %1268 = vmatmul.f32.gmra.mxu0 %v1211
        %v1269 = vpop.f32.mrf.mxu0
        %v1270 = vadd.f32 0.0, %v1269
        %1271 = vmatmul.f32.gmra.mxu0 %v1214
        %v1272 = vpop.f32.mrf.mxu0
        %v1273 = vadd.f32 0.0, %v1272
        %1274 = vmatmul.f32.gmra.mxu0 %v1217
        %v1275 = vpop.f32.mrf.mxu0
        %v1276 = vadd.f32 0.0, %v1275
        %1277 = vmatmul.f32.gmra.mxu0 %v1220
        %v1278 = vpop.f32.mrf.mxu0
        %v1279 = vadd.f32 0.0, %v1278
        %1280 = vmatmul.f32.gmra.mxu0 %v1223
        %v1281 = vpop.f32.mrf.mxu0
        %v1282 = vadd.f32 0.0, %v1281
        %1283 = vmatmul.f32.gmra.mxu0 %v1226
        %v1284 = vpop.f32.mrf.mxu0
        %v1285 = vadd.f32 0.0, %v1284
        %1286 = vmatmul.f32.gmra.mxu0 %v1229
        %v1287 = vpop.f32.mrf.mxu0
        %v1288 = vadd.f32 0.0, %v1287
        %1289 = vmatmul.f32.gmra.mxu0 %v1232
        %v1290 = vpop.f32.mrf.mxu0
        %v1291 = vadd.f32 0.0, %v1290
        %1292 = vdwg.mxu0
        %v1294 = vsel %vm619, %v1163, 0
        %v1297 = vsel %vm619, %v1164, 0
        %v1300 = vsel %vm619, %v1165, 0
        %v1303 = vsel %vm619, %v1166, 0
        %v1306 = vsel %vm619, %v1167, 0
        %v1309 = vsel %vm619, %v1168, 0
        %v1312 = vsel %vm619, %v1169, 0
        %v1315 = vsel %vm619, %v1170, 0
        %v1318 = vsel %vm619, %v1171, 0
        %v1321 = vsel %vm619, %v1172, 0
        %v1324 = vsel %vm619, %v1173, 0
        %v1327 = vsel %vm619, %v1174, 0
        %v1330 = vsel %vm619, %v1175, 0
        %v1333 = vsel %vm619, %v1176, 0
        %1335 = vmatpush.msra.mxu0 0.0
        %1336 = vmatpush.msra.mxu0 0.0
        %1337 = vmatpush.msra.mxu0 %v1119
        %1338 = vmatpush.msra.mxu0 %v1118
        %1339 = vmatpush.msra.mxu0 %v1117
        %1340 = vmatpush.msra.mxu0 %v1116
        %1341 = vmatpush.msra.mxu0 %v1115
        %1342 = vmatpush.msra.mxu0 %v1114
        %1343 = vmatpush.msra.mxu0 %v1113
        %1344 = vmatpush.msra.mxu0 %v1112
        %1345 = vmatpush.msra.mxu0 %v1111
        %1346 = vmatpush.msra.mxu0 %v1110
        %1347 = vmatpush.msra.mxu0 %v1109
        %1348 = vmatpush.msra.mxu0 %v1108
        %1349 = vmatpush.msra.mxu0 %v1107
        %1350 = vmatpush.msra.mxu0 %v1106
        %1351 = vmatmul.f32.gmra.mxu0 %v1294
        %v1352 = vpop.f32.mrf.mxu0
        %v1353 = vadd.f32 %v1252, %v1352
        %1354 = vmatmul.f32.gmra.mxu0 %v1297
        %v1355 = vpop.f32.mrf.mxu0
        %v1356 = vadd.f32 %v1255, %v1355
        %1357 = vmatmul.f32.gmra.mxu0 %v1300
        %v1358 = vpop.f32.mrf.mxu0
        %v1359 = vadd.f32 %v1258, %v1358
        %1360 = vmatmul.f32.gmra.mxu0 %v1303
        %v1361 = vpop.f32.mrf.mxu0
        %v1362 = vadd.f32 %v1261, %v1361
        %1363 = vmatmul.f32.gmra.mxu0 %v1306
        %v1364 = vpop.f32.mrf.mxu0
        %v1365 = vadd.f32 %v1264, %v1364
        %1366 = vmatmul.f32.gmra.mxu0 %v1309
        %v1367 = vpop.f32.mrf.mxu0
        %v1368 = vadd.f32 %v1267, %v1367
        %1369 = vmatmul.f32.gmra.mxu0 %v1312
        %v1370 = vpop.f32.mrf.mxu0
        %v1371 = vadd.f32 %v1270, %v1370
        %1372 = vmatmul.f32.gmra.mxu0 %v1315
        %v1373 = vpop.f32.mrf.mxu0
        %v1374 = vadd.f32 %v1273, %v1373
        %1375 = vmatmul.f32.gmra.mxu0 %v1318
        %v1376 = vpop.f32.mrf.mxu0
        %v1377 = vadd.f32 %v1276, %v1376
        %1378 = vmatmul.f32.gmra.mxu0 %v1321
        %v1379 = vpop.f32.mrf.mxu0
        %v1380 = vadd.f32 %v1279, %v1379
        %1381 = vmatmul.f32.gmra.mxu0 %v1324
        %v1382 = vpop.f32.mrf.mxu0
        %v1383 = vadd.f32 %v1282, %v1382
        %1384 = vmatmul.f32.gmra.mxu0 %v1327
        %v1385 = vpop.f32.mrf.mxu0
        %v1386 = vadd.f32 %v1285, %v1385
        %1387 = vmatmul.f32.gmra.mxu0 %v1330
        %v1388 = vpop.f32.mrf.mxu0
        %v1389 = vadd.f32 %v1288, %v1388
        %1390 = vmatmul.f32.gmra.mxu0 %v1333
        %v1391 = vpop.f32.mrf.mxu0
        %v1392 = vadd.f32 %v1291, %v1391
        %1393 = vdwg.mxu0
        %s1394 = scalar_lea.vmem [#allocation2], 560
        %v1395 = vld [vmem:[%s1394] sm:$0xff]
        %v1396 = vld [vmem:[%s1394 + $0x8] sm:$0xff]
        %v1397 = vld [vmem:[%s1394 + $0x10] sm:$0xff]
        %v1398 = vld [vmem:[%s1394 + $0x18] sm:$0xff]
        %v1399 = vld [vmem:[%s1394 + $0x20] sm:$0xff]
        %v1400 = vld [vmem:[%s1394 + $0x28] sm:$0xff]
        %v1401 = vld [vmem:[%s1394 + $0x30] sm:$0xff]
        %v1402 = vld [vmem:[%s1394 + $0x38] sm:$0xff]
        %v1403 = vld [vmem:[%s1394 + $0x40] sm:$0xff]
        %v1404 = vld [vmem:[%s1394 + $0x48] sm:$0xff]
        %v1405 = vld [vmem:[%s1394 + $0x50] sm:$0xff]
        %v1406 = vld [vmem:[%s1394 + $0x58] sm:$0xff]
        %v1407 = vld [vmem:[%s1394 + $0x60] sm:$0xff]
        %v1408 = vld [vmem:[%s1394 + $0x68] sm:$0xff]
        %v1410 = vsel %vm619, %v1395, 0
        %v1413 = vsel %vm619, %v1396, 0
        %v1416 = vsel %vm619, %v1397, 0
        %v1419 = vsel %vm619, %v1398, 0
        %v1422 = vsel %vm619, %v1399, 0
        %v1425 = vsel %vm619, %v1400, 0
        %v1428 = vsel %vm619, %v1401, 0
        %v1431 = vsel %vm619, %v1402, 0
        %v1434 = vsel %vm619, %v1403, 0
        %v1437 = vsel %vm619, %v1404, 0
        %v1440 = vsel %vm619, %v1405, 0
        %v1443 = vsel %vm619, %v1406, 0
        %v1446 = vsel %vm619, %v1407, 0
        %v1449 = vsel %vm619, %v1408, 0
        %1451 = vmatpush.msra.mxu0 0.0
        %1452 = vmatpush.msra.mxu0 0.0
        %1453 = vmatpush.msra.mxu0 %v1161
        %1454 = vmatpush.msra.mxu0 %v1160
        %1455 = vmatpush.msra.mxu0 %v1159
        %1456 = vmatpush.msra.mxu0 %v1158
        %1457 = vmatpush.msra.mxu0 %v1157
        %1458 = vmatpush.msra.mxu0 %v1156
        %1459 = vmatpush.msra.mxu0 %v1155
        %1460 = vmatpush.msra.mxu0 %v1154
        %1461 = vmatpush.msra.mxu0 %v1153
        %1462 = vmatpush.msra.mxu0 %v1152
        %1463 = vmatpush.msra.mxu0 %v1151
        %1464 = vmatpush.msra.mxu0 %v1150
        %1465 = vmatpush.msra.mxu0 %v1149
        %1466 = vmatpush.msra.mxu0 %v1148
        %1467 = vmatmul.f32.gmra.mxu0 %v1410
        %v1468 = vpop.f32.mrf.mxu0
        %v1469 = vadd.f32 0.0, %v1468
        %1470 = vmatmul.f32.gmra.mxu0 %v1413
        %v1471 = vpop.f32.mrf.mxu0
        %v1472 = vadd.f32 0.0, %v1471
        %1473 = vmatmul.f32.gmra.mxu0 %v1416
        %v1474 = vpop.f32.mrf.mxu0
        %v1475 = vadd.f32 0.0, %v1474
        %1476 = vmatmul.f32.gmra.mxu0 %v1419
        %v1477 = vpop.f32.mrf.mxu0
        %v1478 = vadd.f32 0.0, %v1477
        %1479 = vmatmul.f32.gmra.mxu0 %v1422
        %v1480 = vpop.f32.mrf.mxu0
        %v1481 = vadd.f32 0.0, %v1480
        %1482 = vmatmul.f32.gmra.mxu0 %v1425
        %v1483 = vpop.f32.mrf.mxu0
        %v1484 = vadd.f32 0.0, %v1483
        %1485 = vmatmul.f32.gmra.mxu0 %v1428
        %v1486 = vpop.f32.mrf.mxu0
        %v1487 = vadd.f32 0.0, %v1486
        %1488 = vmatmul.f32.gmra.mxu0 %v1431
        %v1489 = vpop.f32.mrf.mxu0
        %v1490 = vadd.f32 0.0, %v1489
        %1491 = vmatmul.f32.gmra.mxu0 %v1434
        %v1492 = vpop.f32.mrf.mxu0
        %v1493 = vadd.f32 0.0, %v1492
        %1494 = vmatmul.f32.gmra.mxu0 %v1437
        %v1495 = vpop.f32.mrf.mxu0
        %v1496 = vadd.f32 0.0, %v1495
        %1497 = vmatmul.f32.gmra.mxu0 %v1440
        %v1498 = vpop.f32.mrf.mxu0
        %v1499 = vadd.f32 0.0, %v1498
        %1500 = vmatmul.f32.gmra.mxu0 %v1443
        %v1501 = vpop.f32.mrf.mxu0
        %v1502 = vadd.f32 0.0, %v1501
        %1503 = vmatmul.f32.gmra.mxu0 %v1446
        %v1504 = vpop.f32.mrf.mxu0
        %v1505 = vadd.f32 0.0, %v1504
        %1506 = vmatmul.f32.gmra.mxu0 %v1449
        %v1507 = vpop.f32.mrf.mxu0
        %v1508 = vadd.f32 0.0, %v1507
        %1509 = vdwg.mxu0
        %v1510 = vadd.f32 %v1353, %v1469
        %v1511 = vadd.f32 %v1356, %v1472
        %v1512 = vadd.f32 %v1359, %v1475
        %v1513 = vadd.f32 %v1362, %v1478
        %v1514 = vadd.f32 %v1365, %v1481
        %v1515 = vadd.f32 %v1368, %v1484
        %v1516 = vadd.f32 %v1371, %v1487
        %v1517 = vadd.f32 %v1374, %v1490
        %v1518 = vadd.f32 %v1377, %v1493
        %v1519 = vadd.f32 %v1380, %v1496
        %v1520 = vadd.f32 %v1383, %v1499
        %v1521 = vadd.f32 %v1386, %v1502
        %v1522 = vadd.f32 %v1389, %v1505
        %v1523 = vadd.f32 %v1392, %v1508
        %s1524 = scalar_lea.vmem %s4, 112
        %v1525 = vld [vmem:[%s1524] sm:$0xff]
        %v1526 = vld [vmem:[%s1524 + $0x8] sm:$0xff]
        %v1527 = vld [vmem:[%s1524 + $0x10] sm:$0xff]
        %v1528 = vld [vmem:[%s1524 + $0x18] sm:$0xff]
        %v1529 = vld [vmem:[%s1524 + $0x20] sm:$0xff]
        %v1530 = vld [vmem:[%s1524 + $0x28] sm:$0xff]
        %v1531 = vld [vmem:[%s1524 + $0x30] sm:$0xff]
        %v1532 = vld [vmem:[%s1524 + $0x38] sm:$0xff]
        %v1533 = vld [vmem:[%s1524 + $0x40] sm:$0xff]
        %v1534 = vld [vmem:[%s1524 + $0x48] sm:$0xff]
        %v1535 = vld [vmem:[%s1524 + $0x50] sm:$0xff]
        %v1536 = vld [vmem:[%s1524 + $0x58] sm:$0xff]
        %v1537 = vld [vmem:[%s1524 + $0x60] sm:$0xff]
        %v1538 = vld [vmem:[%s1524 + $0x68] sm:$0xff]
        %1540 = vset.pattern.permute.xlu0 0
        %1541 = vperm.xlu0 %1540, %v1525
        %v1542 = vpop.permute.xlu0 %1541
        %1545 = vset.pattern.permute.xlu0 0
        %1546 = vperm.xlu0 %1545, %v1526
        %v1547 = vpop.permute.xlu0 %1546
        %1550 = vset.pattern.permute.xlu0 0
        %1551 = vperm.xlu0 %1550, %v1527
        %v1552 = vpop.permute.xlu0 %1551
        %1555 = vset.pattern.permute.xlu0 0
        %1556 = vperm.xlu0 %1555, %v1528
        %v1557 = vpop.permute.xlu0 %1556
        %1560 = vset.pattern.permute.xlu0 0
        %1561 = vperm.xlu0 %1560, %v1529
        %v1562 = vpop.permute.xlu0 %1561
        %1565 = vset.pattern.permute.xlu0 0
        %1566 = vperm.xlu0 %1565, %v1530
        %v1567 = vpop.permute.xlu0 %1566
        %1570 = vset.pattern.permute.xlu0 0
        %1571 = vperm.xlu0 %1570, %v1531
        %v1572 = vpop.permute.xlu0 %1571
        %1575 = vset.pattern.permute.xlu0 0
        %1576 = vperm.xlu0 %1575, %v1532
        %v1577 = vpop.permute.xlu0 %1576
        %1580 = vset.pattern.permute.xlu0 0
        %1581 = vperm.xlu0 %1580, %v1533
        %v1582 = vpop.permute.xlu0 %1581
        %1585 = vset.pattern.permute.xlu0 0
        %1586 = vperm.xlu0 %1585, %v1534
        %v1587 = vpop.permute.xlu0 %1586
        %1590 = vset.pattern.permute.xlu0 0
        %1591 = vperm.xlu0 %1590, %v1535
        %v1592 = vpop.permute.xlu0 %1591
        %1595 = vset.pattern.permute.xlu0 0
        %1596 = vperm.xlu0 %1595, %v1536
        %v1597 = vpop.permute.xlu0 %1596
        %1600 = vset.pattern.permute.xlu0 0
        %1601 = vperm.xlu0 %1600, %v1537
        %v1602 = vpop.permute.xlu0 %1601
        %1605 = vset.pattern.permute.xlu0 0
        %1606 = vperm.xlu0 %1605, %v1538
        %v1607 = vpop.permute.xlu0 %1606
        %v1609 = vadd.f32 %v1510, %v1542
        %v1610 = vadd.f32 %v1511, %v1547
        %v1611 = vadd.f32 %v1512, %v1552
        %v1612 = vadd.f32 %v1513, %v1557
        %v1613 = vadd.f32 %v1514, %v1562
        %v1614 = vadd.f32 %v1515, %v1567
        %v1615 = vadd.f32 %v1516, %v1572
        %v1616 = vadd.f32 %v1517, %v1577
        %v1617 = vadd.f32 %v1518, %v1582
        %v1618 = vadd.f32 %v1519, %v1587
        %v1619 = vadd.f32 %v1520, %v1592
        %v1620 = vadd.f32 %v1521, %v1597
        %v1621 = vadd.f32 %v1522, %v1602
        %v1622 = vadd.f32 %v1523, %v1607
        %v1623 = vmax.f32 %v1609, 0.0
        %v1624 = vmax.f32 %v1610, 0.0
        %v1625 = vmax.f32 %v1611, 0.0
        %v1626 = vmax.f32 %v1612, 0.0
        %v1627 = vmax.f32 %v1613, 0.0
        %v1628 = vmax.f32 %v1614, 0.0
        %v1629 = vmax.f32 %v1615, 0.0
        %v1630 = vmax.f32 %v1616, 0.0
        %v1631 = vmax.f32 %v1617, 0.0
        %v1632 = vmax.f32 %v1618, 0.0
        %v1633 = vmax.f32 %v1619, 0.0
        %v1634 = vmax.f32 %v1620, 0.0
        %v1635 = vmax.f32 %v1621, 0.0
        %v1636 = vmax.f32 %v1622, 0.0
        %v1637 = vadd.f32 %v1623, %v1064
        %v1638 = vadd.f32 %v1624, %v1065
        %v1639 = vadd.f32 %v1625, %v1066
        %v1640 = vadd.f32 %v1626, %v1067
        %v1641 = vadd.f32 %v1627, %v1068
        %v1642 = vadd.f32 %v1628, %v1069
        %v1643 = vadd.f32 %v1629, %v1070
        %v1644 = vadd.f32 %v1630, %v1071
        %v1645 = vadd.f32 %v1631, %v1072
        %v1646 = vadd.f32 %v1632, %v1073
        %v1647 = vadd.f32 %v1633, %v1074
        %v1648 = vadd.f32 %v1634, %v1075
        %v1649 = vadd.f32 %v1635, %v1076
        %v1650 = vadd.f32 %v1636, %v1077
        %1651 = vrot.lane.b32.xlu0 %v1637, 1
        %v1652 = vpop.permute.xlu0 %1651
        %1653 = vrot.lane.b32.xlu0 %v1638, 1
        %v1654 = vpop.permute.xlu0 %1653
        %1655 = vrot.lane.b32.xlu0 %v1639, 1
        %v1656 = vpop.permute.xlu0 %1655
        %1657 = vrot.lane.b32.xlu0 %v1640, 1
        %v1658 = vpop.permute.xlu0 %1657
        %1659 = vrot.lane.b32.xlu0 %v1641, 1
        %v1660 = vpop.permute.xlu0 %1659
        %1661 = vrot.lane.b32.xlu0 %v1642, 1
        %v1662 = vpop.permute.xlu0 %1661
        %1663 = vrot.lane.b32.xlu0 %v1643, 1
        %v1664 = vpop.permute.xlu0 %1663
        %1665 = vrot.lane.b32.xlu0 %v1644, 1
        %v1666 = vpop.permute.xlu0 %1665
        %1667 = vrot.lane.b32.xlu0 %v1645, 1
        %v1668 = vpop.permute.xlu0 %1667
        %1669 = vrot.lane.b32.xlu0 %v1646, 1
        %v1670 = vpop.permute.xlu0 %1669
        %1671 = vrot.lane.b32.xlu0 %v1647, 1
        %v1672 = vpop.permute.xlu0 %1671
        %1673 = vrot.lane.b32.xlu0 %v1648, 1
        %v1674 = vpop.permute.xlu0 %1673
        %1675 = vrot.lane.b32.xlu0 %v1649, 1
        %v1676 = vpop.permute.xlu0 %1675
        %1677 = vrot.lane.b32.xlu0 %v1650, 1
        %v1678 = vpop.permute.xlu0 %1677
        %v1679 = vsel %vm504, 0.0, %v1652
        %v1680 = vsel %vm504, 0.0, %v1654
        %v1681 = vsel %vm504, 0.0, %v1656
        %v1682 = vsel %vm504, 0.0, %v1658
        %v1683 = vsel %vm504, 0.0, %v1660
        %v1684 = vsel %vm504, 0.0, %v1662
        %v1685 = vsel %vm504, 0.0, %v1664
        %v1686 = vsel %vm504, 0.0, %v1666
        %v1687 = vsel %vm504, 0.0, %v1668
        %v1688 = vsel %vm504, 0.0, %v1670
        %v1689 = vsel %vm504, 0.0, %v1672
        %v1690 = vsel %vm504, 0.0, %v1674
        %v1691 = vsel %vm504, 0.0, %v1676
        %v1692 = vsel %vm504, 0.0, %v1678
        %1693 = vrot.lane.b32.xlu0 %v1637, 127
        %v1694 = vpop.permute.xlu0 %1693
        %1695 = vrot.lane.b32.xlu0 %v1638, 127
        %v1696 = vpop.permute.xlu0 %1695
        %1697 = vrot.lane.b32.xlu0 %v1639, 127
        %v1698 = vpop.permute.xlu0 %1697
        %1699 = vrot.lane.b32.xlu0 %v1640, 127
        %v1700 = vpop.permute.xlu0 %1699
        %1701 = vrot.lane.b32.xlu0 %v1641, 127
        %v1702 = vpop.permute.xlu0 %1701
        %1703 = vrot.lane.b32.xlu0 %v1642, 127
        %v1704 = vpop.permute.xlu0 %1703
        %1705 = vrot.lane.b32.xlu0 %v1643, 127
        %v1706 = vpop.permute.xlu0 %1705
        %1707 = vrot.lane.b32.xlu0 %v1644, 127
        %v1708 = vpop.permute.xlu0 %1707
        %1709 = vrot.lane.b32.xlu0 %v1645, 127
        %v1710 = vpop.permute.xlu0 %1709
        %1711 = vrot.lane.b32.xlu0 %v1646, 127
        %v1712 = vpop.permute.xlu0 %1711
        %1713 = vrot.lane.b32.xlu0 %v1647, 127
        %v1714 = vpop.permute.xlu0 %1713
        %1715 = vrot.lane.b32.xlu0 %v1648, 127
        %v1716 = vpop.permute.xlu0 %1715
        %1717 = vrot.lane.b32.xlu0 %v1649, 127
        %v1718 = vpop.permute.xlu0 %1717
        %1719 = vrot.lane.b32.xlu0 %v1650, 127
        %v1720 = vpop.permute.xlu0 %1719
        %v1721 = vsel %vm505, 0.0, %v1694
        %v1722 = vsel %vm505, 0.0, %v1696
        %v1723 = vsel %vm505, 0.0, %v1698
        %v1724 = vsel %vm505, 0.0, %v1700
        %v1725 = vsel %vm505, 0.0, %v1702
        %v1726 = vsel %vm505, 0.0, %v1704
        %v1727 = vsel %vm505, 0.0, %v1706
        %v1728 = vsel %vm505, 0.0, %v1708
        %v1729 = vsel %vm505, 0.0, %v1710
        %v1730 = vsel %vm505, 0.0, %v1712
        %v1731 = vsel %vm505, 0.0, %v1714
        %v1732 = vsel %vm505, 0.0, %v1716
        %v1733 = vsel %vm505, 0.0, %v1718
        %v1734 = vsel %vm505, 0.0, %v1720
        %s1735 = scalar_lea.vmem [#allocation2], 672
        %v1736 = vld [vmem:[%s1735] sm:$0xff]
        %v1737 = vld [vmem:[%s1735 + $0x8] sm:$0xff]
        %v1738 = vld [vmem:[%s1735 + $0x10] sm:$0xff]
        %v1739 = vld [vmem:[%s1735 + $0x18] sm:$0xff]
        %v1740 = vld [vmem:[%s1735 + $0x20] sm:$0xff]
        %v1741 = vld [vmem:[%s1735 + $0x28] sm:$0xff]
        %v1742 = vld [vmem:[%s1735 + $0x30] sm:$0xff]
        %v1743 = vld [vmem:[%s1735 + $0x38] sm:$0xff]
        %v1744 = vld [vmem:[%s1735 + $0x40] sm:$0xff]
        %v1745 = vld [vmem:[%s1735 + $0x48] sm:$0xff]
        %v1746 = vld [vmem:[%s1735 + $0x50] sm:$0xff]
        %v1747 = vld [vmem:[%s1735 + $0x58] sm:$0xff]
        %v1748 = vld [vmem:[%s1735 + $0x60] sm:$0xff]
        %v1749 = vld [vmem:[%s1735 + $0x68] sm:$0xff]
        %s1750 = scalar_lea.vmem [#allocation2], 784
        %v1751 = vld [vmem:[%s1750] sm:$0xff]
        %v1752 = vld [vmem:[%s1750 + $0x8] sm:$0xff]
        %v1753 = vld [vmem:[%s1750 + $0x10] sm:$0xff]
        %v1754 = vld [vmem:[%s1750 + $0x18] sm:$0xff]
        %v1755 = vld [vmem:[%s1750 + $0x20] sm:$0xff]
        %v1756 = vld [vmem:[%s1750 + $0x28] sm:$0xff]
        %v1757 = vld [vmem:[%s1750 + $0x30] sm:$0xff]
        %v1758 = vld [vmem:[%s1750 + $0x38] sm:$0xff]
        %v1759 = vld [vmem:[%s1750 + $0x40] sm:$0xff]
        %v1760 = vld [vmem:[%s1750 + $0x48] sm:$0xff]
        %v1761 = vld [vmem:[%s1750 + $0x50] sm:$0xff]
        %v1762 = vld [vmem:[%s1750 + $0x58] sm:$0xff]
        %v1763 = vld [vmem:[%s1750 + $0x60] sm:$0xff]
        %v1764 = vld [vmem:[%s1750 + $0x68] sm:$0xff]
        %v1766 = vsel %vm619, %v1751, 0
        %v1769 = vsel %vm619, %v1752, 0
        %v1772 = vsel %vm619, %v1753, 0
        %v1775 = vsel %vm619, %v1754, 0
        %v1778 = vsel %vm619, %v1755, 0
        %v1781 = vsel %vm619, %v1756, 0
        %v1784 = vsel %vm619, %v1757, 0
        %v1787 = vsel %vm619, %v1758, 0
        %v1790 = vsel %vm619, %v1759, 0
        %v1793 = vsel %vm619, %v1760, 0
        %v1796 = vsel %vm619, %v1761, 0
        %v1799 = vsel %vm619, %v1762, 0
        %v1802 = vsel %vm619, %v1763, 0
        %v1805 = vsel %vm619, %v1764, 0
        %1807 = vmatpush.msra.mxu0 0.0
        %1808 = vmatpush.msra.mxu0 0.0
        %1809 = vmatpush.msra.mxu0 %v1650
        %1810 = vmatpush.msra.mxu0 %v1649
        %1811 = vmatpush.msra.mxu0 %v1648
        %1812 = vmatpush.msra.mxu0 %v1647
        %1813 = vmatpush.msra.mxu0 %v1646
        %1814 = vmatpush.msra.mxu0 %v1645
        %1815 = vmatpush.msra.mxu0 %v1644
        %1816 = vmatpush.msra.mxu0 %v1643
        %1817 = vmatpush.msra.mxu0 %v1642
        %1818 = vmatpush.msra.mxu0 %v1641
        %1819 = vmatpush.msra.mxu0 %v1640
        %1820 = vmatpush.msra.mxu0 %v1639
        %1821 = vmatpush.msra.mxu0 %v1638
        %1822 = vmatpush.msra.mxu0 %v1637
        %1823 = vmatmul.f32.gmra.mxu0 %v1766
        %v1824 = vpop.f32.mrf.mxu0
        %v1825 = vadd.f32 0.0, %v1824
        %1826 = vmatmul.f32.gmra.mxu0 %v1769
        %v1827 = vpop.f32.mrf.mxu0
        %v1828 = vadd.f32 0.0, %v1827
        %1829 = vmatmul.f32.gmra.mxu0 %v1772
        %v1830 = vpop.f32.mrf.mxu0
        %v1831 = vadd.f32 0.0, %v1830
        %1832 = vmatmul.f32.gmra.mxu0 %v1775
        %v1833 = vpop.f32.mrf.mxu0
        %v1834 = vadd.f32 0.0, %v1833
        %1835 = vmatmul.f32.gmra.mxu0 %v1778
        %v1836 = vpop.f32.mrf.mxu0
        %v1837 = vadd.f32 0.0, %v1836
        %1838 = vmatmul.f32.gmra.mxu0 %v1781
        %v1839 = vpop.f32.mrf.mxu0
        %v1840 = vadd.f32 0.0, %v1839
        %1841 = vmatmul.f32.gmra.mxu0 %v1784
        %v1842 = vpop.f32.mrf.mxu0
        %v1843 = vadd.f32 0.0, %v1842
        %1844 = vmatmul.f32.gmra.mxu0 %v1787
        %v1845 = vpop.f32.mrf.mxu0
        %v1846 = vadd.f32 0.0, %v1845
        %1847 = vmatmul.f32.gmra.mxu0 %v1790
        %v1848 = vpop.f32.mrf.mxu0
        %v1849 = vadd.f32 0.0, %v1848
        %1850 = vmatmul.f32.gmra.mxu0 %v1793
        %v1851 = vpop.f32.mrf.mxu0
        %v1852 = vadd.f32 0.0, %v1851
        %1853 = vmatmul.f32.gmra.mxu0 %v1796
        %v1854 = vpop.f32.mrf.mxu0
        %v1855 = vadd.f32 0.0, %v1854
        %1856 = vmatmul.f32.gmra.mxu0 %v1799
        %v1857 = vpop.f32.mrf.mxu0
        %v1858 = vadd.f32 0.0, %v1857
        %1859 = vmatmul.f32.gmra.mxu0 %v1802
        %v1860 = vpop.f32.mrf.mxu0
        %v1861 = vadd.f32 0.0, %v1860
        %1862 = vmatmul.f32.gmra.mxu0 %v1805
        %v1863 = vpop.f32.mrf.mxu0
        %v1864 = vadd.f32 0.0, %v1863
        %1865 = vdwg.mxu0
        %v1867 = vsel %vm619, %v1736, 0
        %v1870 = vsel %vm619, %v1737, 0
        %v1873 = vsel %vm619, %v1738, 0
        %v1876 = vsel %vm619, %v1739, 0
        %v1879 = vsel %vm619, %v1740, 0
        %v1882 = vsel %vm619, %v1741, 0
        %v1885 = vsel %vm619, %v1742, 0
        %v1888 = vsel %vm619, %v1743, 0
        %v1891 = vsel %vm619, %v1744, 0
        %v1894 = vsel %vm619, %v1745, 0
        %v1897 = vsel %vm619, %v1746, 0
        %v1900 = vsel %vm619, %v1747, 0
        %v1903 = vsel %vm619, %v1748, 0
        %v1906 = vsel %vm619, %v1749, 0
        %1908 = vmatpush.msra.mxu0 0.0
        %1909 = vmatpush.msra.mxu0 0.0
        %1910 = vmatpush.msra.mxu0 %v1692
        %1911 = vmatpush.msra.mxu0 %v1691
        %1912 = vmatpush.msra.mxu0 %v1690
        %1913 = vmatpush.msra.mxu0 %v1689
        %1914 = vmatpush.msra.mxu0 %v1688
        %1915 = vmatpush.msra.mxu0 %v1687
        %1916 = vmatpush.msra.mxu0 %v1686
        %1917 = vmatpush.msra.mxu0 %v1685
        %1918 = vmatpush.msra.mxu0 %v1684
        %1919 = vmatpush.msra.mxu0 %v1683
        %1920 = vmatpush.msra.mxu0 %v1682
        %1921 = vmatpush.msra.mxu0 %v1681
        %1922 = vmatpush.msra.mxu0 %v1680
        %1923 = vmatpush.msra.mxu0 %v1679
        %1924 = vmatmul.f32.gmra.mxu0 %v1867
        %v1925 = vpop.f32.mrf.mxu0
        %v1926 = vadd.f32 %v1825, %v1925
        %1927 = vmatmul.f32.gmra.mxu0 %v1870
        %v1928 = vpop.f32.mrf.mxu0
        %v1929 = vadd.f32 %v1828, %v1928
        %1930 = vmatmul.f32.gmra.mxu0 %v1873
        %v1931 = vpop.f32.mrf.mxu0
        %v1932 = vadd.f32 %v1831, %v1931
        %1933 = vmatmul.f32.gmra.mxu0 %v1876
        %v1934 = vpop.f32.mrf.mxu0
        %v1935 = vadd.f32 %v1834, %v1934
        %1936 = vmatmul.f32.gmra.mxu0 %v1879
        %v1937 = vpop.f32.mrf.mxu0
        %v1938 = vadd.f32 %v1837, %v1937
        %1939 = vmatmul.f32.gmra.mxu0 %v1882
        %v1940 = vpop.f32.mrf.mxu0
        %v1941 = vadd.f32 %v1840, %v1940
        %1942 = vmatmul.f32.gmra.mxu0 %v1885
        %v1943 = vpop.f32.mrf.mxu0
        %v1944 = vadd.f32 %v1843, %v1943
        %1945 = vmatmul.f32.gmra.mxu0 %v1888
        %v1946 = vpop.f32.mrf.mxu0
        %v1947 = vadd.f32 %v1846, %v1946
        %1948 = vmatmul.f32.gmra.mxu0 %v1891
        %v1949 = vpop.f32.mrf.mxu0
        %v1950 = vadd.f32 %v1849, %v1949
        %1951 = vmatmul.f32.gmra.mxu0 %v1894
        %v1952 = vpop.f32.mrf.mxu0
        %v1953 = vadd.f32 %v1852, %v1952
        %1954 = vmatmul.f32.gmra.mxu0 %v1897
        %v1955 = vpop.f32.mrf.mxu0
        %v1956 = vadd.f32 %v1855, %v1955
        %1957 = vmatmul.f32.gmra.mxu0 %v1900
        %v1958 = vpop.f32.mrf.mxu0
        %v1959 = vadd.f32 %v1858, %v1958
        %1960 = vmatmul.f32.gmra.mxu0 %v1903
        %v1961 = vpop.f32.mrf.mxu0
        %v1962 = vadd.f32 %v1861, %v1961
        %1963 = vmatmul.f32.gmra.mxu0 %v1906
        %v1964 = vpop.f32.mrf.mxu0
        %v1965 = vadd.f32 %v1864, %v1964
        %1966 = vdwg.mxu0
        %s1967 = scalar_lea.vmem [#allocation2], 896
        %v1968 = vld [vmem:[%s1967] sm:$0xff]
        %v1969 = vld [vmem:[%s1967 + $0x8] sm:$0xff]
        %v1970 = vld [vmem:[%s1967 + $0x10] sm:$0xff]
        %v1971 = vld [vmem:[%s1967 + $0x18] sm:$0xff]
        %v1972 = vld [vmem:[%s1967 + $0x20] sm:$0xff]
        %v1973 = vld [vmem:[%s1967 + $0x28] sm:$0xff]
        %v1974 = vld [vmem:[%s1967 + $0x30] sm:$0xff]
        %v1975 = vld [vmem:[%s1967 + $0x38] sm:$0xff]
        %v1976 = vld [vmem:[%s1967 + $0x40] sm:$0xff]
        %v1977 = vld [vmem:[%s1967 + $0x48] sm:$0xff]
        %v1978 = vld [vmem:[%s1967 + $0x50] sm:$0xff]
        %v1979 = vld [vmem:[%s1967 + $0x58] sm:$0xff]
        %v1980 = vld [vmem:[%s1967 + $0x60] sm:$0xff]
        %v1981 = vld [vmem:[%s1967 + $0x68] sm:$0xff]
        %v1983 = vsel %vm619, %v1968, 0
        %v1986 = vsel %vm619, %v1969, 0
        %v1989 = vsel %vm619, %v1970, 0
        %v1992 = vsel %vm619, %v1971, 0
        %v1995 = vsel %vm619, %v1972, 0
        %v1998 = vsel %vm619, %v1973, 0
        %v2001 = vsel %vm619, %v1974, 0
        %v2004 = vsel %vm619, %v1975, 0
        %v2007 = vsel %vm619, %v1976, 0
        %v2010 = vsel %vm619, %v1977, 0
        %v2013 = vsel %vm619, %v1978, 0
        %v2016 = vsel %vm619, %v1979, 0
        %v2019 = vsel %vm619, %v1980, 0
        %v2022 = vsel %vm619, %v1981, 0
        %2024 = vmatpush.msra.mxu0 0.0
        %2025 = vmatpush.msra.mxu0 0.0
        %2026 = vmatpush.msra.mxu0 %v1734
        %2027 = vmatpush.msra.mxu0 %v1733
        %2028 = vmatpush.msra.mxu0 %v1732
        %2029 = vmatpush.msra.mxu0 %v1731
        %2030 = vmatpush.msra.mxu0 %v1730
        %2031 = vmatpush.msra.mxu0 %v1729
        %2032 = vmatpush.msra.mxu0 %v1728
        %2033 = vmatpush.msra.mxu0 %v1727
        %2034 = vmatpush.msra.mxu0 %v1726
        %2035 = vmatpush.msra.mxu0 %v1725
        %2036 = vmatpush.msra.mxu0 %v1724
        %2037 = vmatpush.msra.mxu0 %v1723
        %2038 = vmatpush.msra.mxu0 %v1722
        %2039 = vmatpush.msra.mxu0 %v1721
        %2040 = vmatmul.f32.gmra.mxu0 %v1983
        %v2041 = vpop.f32.mrf.mxu0
        %v2042 = vadd.f32 0.0, %v2041
        %2043 = vmatmul.f32.gmra.mxu0 %v1986
        %v2044 = vpop.f32.mrf.mxu0
        %v2045 = vadd.f32 0.0, %v2044
        %2046 = vmatmul.f32.gmra.mxu0 %v1989
        %v2047 = vpop.f32.mrf.mxu0
        %v2048 = vadd.f32 0.0, %v2047
        %2049 = vmatmul.f32.gmra.mxu0 %v1992
        %v2050 = vpop.f32.mrf.mxu0
        %v2051 = vadd.f32 0.0, %v2050
        %2052 = vmatmul.f32.gmra.mxu0 %v1995
        %v2053 = vpop.f32.mrf.mxu0
        %v2054 = vadd.f32 0.0, %v2053
        %2055 = vmatmul.f32.gmra.mxu0 %v1998
        %v2056 = vpop.f32.mrf.mxu0
        %v2057 = vadd.f32 0.0, %v2056
        %2058 = vmatmul.f32.gmra.mxu0 %v2001
        %v2059 = vpop.f32.mrf.mxu0
        %v2060 = vadd.f32 0.0, %v2059
        %2061 = vmatmul.f32.gmra.mxu0 %v2004
        %v2062 = vpop.f32.mrf.mxu0
        %v2063 = vadd.f32 0.0, %v2062
        %2064 = vmatmul.f32.gmra.mxu0 %v2007
        %v2065 = vpop.f32.mrf.mxu0
        %v2066 = vadd.f32 0.0, %v2065
        %2067 = vmatmul.f32.gmra.mxu0 %v2010
        %v2068 = vpop.f32.mrf.mxu0
        %v2069 = vadd.f32 0.0, %v2068
        %2070 = vmatmul.f32.gmra.mxu0 %v2013
        %v2071 = vpop.f32.mrf.mxu0
        %v2072 = vadd.f32 0.0, %v2071
        %2073 = vmatmul.f32.gmra.mxu0 %v2016
        %v2074 = vpop.f32.mrf.mxu0
        %v2075 = vadd.f32 0.0, %v2074
        %2076 = vmatmul.f32.gmra.mxu0 %v2019
        %v2077 = vpop.f32.mrf.mxu0
        %v2078 = vadd.f32 0.0, %v2077
        %2079 = vmatmul.f32.gmra.mxu0 %v2022
        %v2080 = vpop.f32.mrf.mxu0
        %v2081 = vadd.f32 0.0, %v2080
        %2082 = vdwg.mxu0
        %v2083 = vadd.f32 %v1926, %v2042
        %v2084 = vadd.f32 %v1929, %v2045
        %v2085 = vadd.f32 %v1932, %v2048
        %v2086 = vadd.f32 %v1935, %v2051
        %v2087 = vadd.f32 %v1938, %v2054
        %v2088 = vadd.f32 %v1941, %v2057
        %v2089 = vadd.f32 %v1944, %v2060
        %v2090 = vadd.f32 %v1947, %v2063
        %v2091 = vadd.f32 %v1950, %v2066
        %v2092 = vadd.f32 %v1953, %v2069
        %v2093 = vadd.f32 %v1956, %v2072
        %v2094 = vadd.f32 %v1959, %v2075
        %v2095 = vadd.f32 %v1962, %v2078
        %v2096 = vadd.f32 %v1965, %v2081
        %s2097 = scalar_lea.vmem %s4, 224
        %v2098 = vld [vmem:[%s2097] sm:$0xff]
        %v2099 = vld [vmem:[%s2097 + $0x8] sm:$0xff]
        %v2100 = vld [vmem:[%s2097 + $0x10] sm:$0xff]
        %v2101 = vld [vmem:[%s2097 + $0x18] sm:$0xff]
        %v2102 = vld [vmem:[%s2097 + $0x20] sm:$0xff]
        %v2103 = vld [vmem:[%s2097 + $0x28] sm:$0xff]
        %v2104 = vld [vmem:[%s2097 + $0x30] sm:$0xff]
        %v2105 = vld [vmem:[%s2097 + $0x38] sm:$0xff]
        %v2106 = vld [vmem:[%s2097 + $0x40] sm:$0xff]
        %v2107 = vld [vmem:[%s2097 + $0x48] sm:$0xff]
        %v2108 = vld [vmem:[%s2097 + $0x50] sm:$0xff]
        %v2109 = vld [vmem:[%s2097 + $0x58] sm:$0xff]
        %v2110 = vld [vmem:[%s2097 + $0x60] sm:$0xff]
        %v2111 = vld [vmem:[%s2097 + $0x68] sm:$0xff]
        %2113 = vset.pattern.permute.xlu0 0
        %2114 = vperm.xlu0 %2113, %v2098
        %v2115 = vpop.permute.xlu0 %2114
        %2118 = vset.pattern.permute.xlu0 0
        %2119 = vperm.xlu0 %2118, %v2099
        %v2120 = vpop.permute.xlu0 %2119
        %2123 = vset.pattern.permute.xlu0 0
        %2124 = vperm.xlu0 %2123, %v2100
        %v2125 = vpop.permute.xlu0 %2124
        %2128 = vset.pattern.permute.xlu0 0
        %2129 = vperm.xlu0 %2128, %v2101
        %v2130 = vpop.permute.xlu0 %2129
        %2133 = vset.pattern.permute.xlu0 0
        %2134 = vperm.xlu0 %2133, %v2102
        %v2135 = vpop.permute.xlu0 %2134
        %2138 = vset.pattern.permute.xlu0 0
        %2139 = vperm.xlu0 %2138, %v2103
        %v2140 = vpop.permute.xlu0 %2139
        %2143 = vset.pattern.permute.xlu0 0
        %2144 = vperm.xlu0 %2143, %v2104
        %v2145 = vpop.permute.xlu0 %2144
        %2148 = vset.pattern.permute.xlu0 0
        %2149 = vperm.xlu0 %2148, %v2105
        %v2150 = vpop.permute.xlu0 %2149
        %2153 = vset.pattern.permute.xlu0 0
        %2154 = vperm.xlu0 %2153, %v2106
        %v2155 = vpop.permute.xlu0 %2154
        %2158 = vset.pattern.permute.xlu0 0
        %2159 = vperm.xlu0 %2158, %v2107
        %v2160 = vpop.permute.xlu0 %2159
        %2163 = vset.pattern.permute.xlu0 0
        %2164 = vperm.xlu0 %2163, %v2108
        %v2165 = vpop.permute.xlu0 %2164
        %2168 = vset.pattern.permute.xlu0 0
        %2169 = vperm.xlu0 %2168, %v2109
        %v2170 = vpop.permute.xlu0 %2169
        %2173 = vset.pattern.permute.xlu0 0
        %2174 = vperm.xlu0 %2173, %v2110
        %v2175 = vpop.permute.xlu0 %2174
        %2178 = vset.pattern.permute.xlu0 0
        %2179 = vperm.xlu0 %2178, %v2111
        %v2180 = vpop.permute.xlu0 %2179
        %v2182 = vadd.f32 %v2083, %v2115
        %v2183 = vadd.f32 %v2084, %v2120
        %v2184 = vadd.f32 %v2085, %v2125
        %v2185 = vadd.f32 %v2086, %v2130
        %v2186 = vadd.f32 %v2087, %v2135
        %v2187 = vadd.f32 %v2088, %v2140
        %v2188 = vadd.f32 %v2089, %v2145
        %v2189 = vadd.f32 %v2090, %v2150
        %v2190 = vadd.f32 %v2091, %v2155
        %v2191 = vadd.f32 %v2092, %v2160
        %v2192 = vadd.f32 %v2093, %v2165
        %v2193 = vadd.f32 %v2094, %v2170
        %v2194 = vadd.f32 %v2095, %v2175
        %v2195 = vadd.f32 %v2096, %v2180
        %v2196 = vmax.f32 %v2182, 0.0
        %v2197 = vmax.f32 %v2183, 0.0
        %v2198 = vmax.f32 %v2184, 0.0
        %v2199 = vmax.f32 %v2185, 0.0
        %v2200 = vmax.f32 %v2186, 0.0
        %v2201 = vmax.f32 %v2187, 0.0
        %v2202 = vmax.f32 %v2188, 0.0
        %v2203 = vmax.f32 %v2189, 0.0
        %v2204 = vmax.f32 %v2190, 0.0
        %v2205 = vmax.f32 %v2191, 0.0
        %v2206 = vmax.f32 %v2192, 0.0
        %v2207 = vmax.f32 %v2193, 0.0
        %v2208 = vmax.f32 %v2194, 0.0
        %v2209 = vmax.f32 %v2195, 0.0
        %v2210 = vadd.f32 %v2196, %v1637
        %v2211 = vadd.f32 %v2197, %v1638
        %v2212 = vadd.f32 %v2198, %v1639
        %v2213 = vadd.f32 %v2199, %v1640
        %v2214 = vadd.f32 %v2200, %v1641
        %v2215 = vadd.f32 %v2201, %v1642
        %v2216 = vadd.f32 %v2202, %v1643
        %v2217 = vadd.f32 %v2203, %v1644
        %v2218 = vadd.f32 %v2204, %v1645
        %v2219 = vadd.f32 %v2205, %v1646
        %v2220 = vadd.f32 %v2206, %v1647
        %v2221 = vadd.f32 %v2207, %v1648
        %v2222 = vadd.f32 %v2208, %v1649
        %v2223 = vadd.f32 %v2209, %v1650
        %2224 = vrot.lane.b32.xlu0 %v2210, 1
        %v2225 = vpop.permute.xlu0 %2224
        %2226 = vrot.lane.b32.xlu0 %v2211, 1
        %v2227 = vpop.permute.xlu0 %2226
        %2228 = vrot.lane.b32.xlu0 %v2212, 1
        %v2229 = vpop.permute.xlu0 %2228
        %2230 = vrot.lane.b32.xlu0 %v2213, 1
        %v2231 = vpop.permute.xlu0 %2230
        %2232 = vrot.lane.b32.xlu0 %v2214, 1
        %v2233 = vpop.permute.xlu0 %2232
        %2234 = vrot.lane.b32.xlu0 %v2215, 1
        %v2235 = vpop.permute.xlu0 %2234
        %2236 = vrot.lane.b32.xlu0 %v2216, 1
        %v2237 = vpop.permute.xlu0 %2236
        %2238 = vrot.lane.b32.xlu0 %v2217, 1
        %v2239 = vpop.permute.xlu0 %2238
        %2240 = vrot.lane.b32.xlu0 %v2218, 1
        %v2241 = vpop.permute.xlu0 %2240
        %2242 = vrot.lane.b32.xlu0 %v2219, 1
        %v2243 = vpop.permute.xlu0 %2242
        %2244 = vrot.lane.b32.xlu0 %v2220, 1
        %v2245 = vpop.permute.xlu0 %2244
        %2246 = vrot.lane.b32.xlu0 %v2221, 1
        %v2247 = vpop.permute.xlu0 %2246
        %2248 = vrot.lane.b32.xlu0 %v2222, 1
        %v2249 = vpop.permute.xlu0 %2248
        %2250 = vrot.lane.b32.xlu0 %v2223, 1
        %v2251 = vpop.permute.xlu0 %2250
        %v2252 = vsel %vm504, 0.0, %v2225
        %v2253 = vsel %vm504, 0.0, %v2227
        %v2254 = vsel %vm504, 0.0, %v2229
        %v2255 = vsel %vm504, 0.0, %v2231
        %v2256 = vsel %vm504, 0.0, %v2233
        %v2257 = vsel %vm504, 0.0, %v2235
        %v2258 = vsel %vm504, 0.0, %v2237
        %v2259 = vsel %vm504, 0.0, %v2239
        %v2260 = vsel %vm504, 0.0, %v2241
        %v2261 = vsel %vm504, 0.0, %v2243
        %v2262 = vsel %vm504, 0.0, %v2245
        %v2263 = vsel %vm504, 0.0, %v2247
        %v2264 = vsel %vm504, 0.0, %v2249
        %v2265 = vsel %vm504, 0.0, %v2251
        %2266 = vrot.lane.b32.xlu0 %v2210, 127
        %v2267 = vpop.permute.xlu0 %2266
        %2268 = vrot.lane.b32.xlu0 %v2211, 127
        %v2269 = vpop.permute.xlu0 %2268
        %2270 = vrot.lane.b32.xlu0 %v2212, 127
        %v2271 = vpop.permute.xlu0 %2270
        %2272 = vrot.lane.b32.xlu0 %v2213, 127
        %v2273 = vpop.permute.xlu0 %2272
        %2274 = vrot.lane.b32.xlu0 %v2214, 127
        %v2275 = vpop.permute.xlu0 %2274
        %2276 = vrot.lane.b32.xlu0 %v2215, 127
        %v2277 = vpop.permute.xlu0 %2276
        %2278 = vrot.lane.b32.xlu0 %v2216, 127
        %v2279 = vpop.permute.xlu0 %2278
        %2280 = vrot.lane.b32.xlu0 %v2217, 127
        %v2281 = vpop.permute.xlu0 %2280
        %2282 = vrot.lane.b32.xlu0 %v2218, 127
        %v2283 = vpop.permute.xlu0 %2282
        %2284 = vrot.lane.b32.xlu0 %v2219, 127
        %v2285 = vpop.permute.xlu0 %2284
        %2286 = vrot.lane.b32.xlu0 %v2220, 127
        %v2287 = vpop.permute.xlu0 %2286
        %2288 = vrot.lane.b32.xlu0 %v2221, 127
        %v2289 = vpop.permute.xlu0 %2288
        %2290 = vrot.lane.b32.xlu0 %v2222, 127
        %v2291 = vpop.permute.xlu0 %2290
        %2292 = vrot.lane.b32.xlu0 %v2223, 127
        %v2293 = vpop.permute.xlu0 %2292
        %v2294 = vsel %vm505, 0.0, %v2267
        %v2295 = vsel %vm505, 0.0, %v2269
        %v2296 = vsel %vm505, 0.0, %v2271
        %v2297 = vsel %vm505, 0.0, %v2273
        %v2298 = vsel %vm505, 0.0, %v2275
        %v2299 = vsel %vm505, 0.0, %v2277
        %v2300 = vsel %vm505, 0.0, %v2279
        %v2301 = vsel %vm505, 0.0, %v2281
        %v2302 = vsel %vm505, 0.0, %v2283
        %v2303 = vsel %vm505, 0.0, %v2285
        %v2304 = vsel %vm505, 0.0, %v2287
        %v2305 = vsel %vm505, 0.0, %v2289
        %v2306 = vsel %vm505, 0.0, %v2291
        %v2307 = vsel %vm505, 0.0, %v2293
        %s2308 = scalar_lea.vmem [#allocation2], 1008
        %v2309 = vld [vmem:[%s2308] sm:$0xff]
        %v2310 = vld [vmem:[%s2308 + $0x8] sm:$0xff]
        %v2311 = vld [vmem:[%s2308 + $0x10] sm:$0xff]
        %v2312 = vld [vmem:[%s2308 + $0x18] sm:$0xff]
        %v2313 = vld [vmem:[%s2308 + $0x20] sm:$0xff]
        %v2314 = vld [vmem:[%s2308 + $0x28] sm:$0xff]
        %v2315 = vld [vmem:[%s2308 + $0x30] sm:$0xff]
        %v2316 = vld [vmem:[%s2308 + $0x38] sm:$0xff]
        %v2317 = vld [vmem:[%s2308 + $0x40] sm:$0xff]
        %v2318 = vld [vmem:[%s2308 + $0x48] sm:$0xff]
        %v2319 = vld [vmem:[%s2308 + $0x50] sm:$0xff]
        %v2320 = vld [vmem:[%s2308 + $0x58] sm:$0xff]
        %v2321 = vld [vmem:[%s2308 + $0x60] sm:$0xff]
        %v2322 = vld [vmem:[%s2308 + $0x68] sm:$0xff]
        %s2323 = scalar_lea.vmem [#allocation2], 1120
        %v2324 = vld [vmem:[%s2323] sm:$0xff]
        %v2325 = vld [vmem:[%s2323 + $0x8] sm:$0xff]
        %v2326 = vld [vmem:[%s2323 + $0x10] sm:$0xff]
        %v2327 = vld [vmem:[%s2323 + $0x18] sm:$0xff]
        %v2328 = vld [vmem:[%s2323 + $0x20] sm:$0xff]
        %v2329 = vld [vmem:[%s2323 + $0x28] sm:$0xff]
        %v2330 = vld [vmem:[%s2323 + $0x30] sm:$0xff]
        %v2331 = vld [vmem:[%s2323 + $0x38] sm:$0xff]
        %v2332 = vld [vmem:[%s2323 + $0x40] sm:$0xff]
        %v2333 = vld [vmem:[%s2323 + $0x48] sm:$0xff]
        %v2334 = vld [vmem:[%s2323 + $0x50] sm:$0xff]
        %v2335 = vld [vmem:[%s2323 + $0x58] sm:$0xff]
        %v2336 = vld [vmem:[%s2323 + $0x60] sm:$0xff]
        %v2337 = vld [vmem:[%s2323 + $0x68] sm:$0xff]
        %v2339 = vsel %vm619, %v2324, 0
        %v2342 = vsel %vm619, %v2325, 0
        %v2345 = vsel %vm619, %v2326, 0
        %v2348 = vsel %vm619, %v2327, 0
        %v2351 = vsel %vm619, %v2328, 0
        %v2354 = vsel %vm619, %v2329, 0
        %v2357 = vsel %vm619, %v2330, 0
        %v2360 = vsel %vm619, %v2331, 0
        %v2363 = vsel %vm619, %v2332, 0
        %v2366 = vsel %vm619, %v2333, 0
        %v2369 = vsel %vm619, %v2334, 0
        %v2372 = vsel %vm619, %v2335, 0
        %v2375 = vsel %vm619, %v2336, 0
        %v2378 = vsel %vm619, %v2337, 0
        %2380 = vmatpush.msra.mxu0 0.0
        %2381 = vmatpush.msra.mxu0 0.0
        %2382 = vmatpush.msra.mxu0 %v2223
        %2383 = vmatpush.msra.mxu0 %v2222
        %2384 = vmatpush.msra.mxu0 %v2221
        %2385 = vmatpush.msra.mxu0 %v2220
        %2386 = vmatpush.msra.mxu0 %v2219
        %2387 = vmatpush.msra.mxu0 %v2218
        %2388 = vmatpush.msra.mxu0 %v2217
        %2389 = vmatpush.msra.mxu0 %v2216
        %2390 = vmatpush.msra.mxu0 %v2215
        %2391 = vmatpush.msra.mxu0 %v2214
        %2392 = vmatpush.msra.mxu0 %v2213
        %2393 = vmatpush.msra.mxu0 %v2212
        %2394 = vmatpush.msra.mxu0 %v2211
        %2395 = vmatpush.msra.mxu0 %v2210
        %2396 = vmatmul.f32.gmra.mxu0 %v2339
        %v2397 = vpop.f32.mrf.mxu0
        %v2398 = vadd.f32 0.0, %v2397
        %2399 = vmatmul.f32.gmra.mxu0 %v2342
        %v2400 = vpop.f32.mrf.mxu0
        %v2401 = vadd.f32 0.0, %v2400
        %2402 = vmatmul.f32.gmra.mxu0 %v2345
        %v2403 = vpop.f32.mrf.mxu0
        %v2404 = vadd.f32 0.0, %v2403
        %2405 = vmatmul.f32.gmra.mxu0 %v2348
        %v2406 = vpop.f32.mrf.mxu0
        %v2407 = vadd.f32 0.0, %v2406
        %2408 = vmatmul.f32.gmra.mxu0 %v2351
        %v2409 = vpop.f32.mrf.mxu0
        %v2410 = vadd.f32 0.0, %v2409
        %2411 = vmatmul.f32.gmra.mxu0 %v2354
        %v2412 = vpop.f32.mrf.mxu0
        %v2413 = vadd.f32 0.0, %v2412
        %2414 = vmatmul.f32.gmra.mxu0 %v2357
        %v2415 = vpop.f32.mrf.mxu0
        %v2416 = vadd.f32 0.0, %v2415
        %2417 = vmatmul.f32.gmra.mxu0 %v2360
        %v2418 = vpop.f32.mrf.mxu0
        %v2419 = vadd.f32 0.0, %v2418
        %2420 = vmatmul.f32.gmra.mxu0 %v2363
        %v2421 = vpop.f32.mrf.mxu0
        %v2422 = vadd.f32 0.0, %v2421
        %2423 = vmatmul.f32.gmra.mxu0 %v2366
        %v2424 = vpop.f32.mrf.mxu0
        %v2425 = vadd.f32 0.0, %v2424
        %2426 = vmatmul.f32.gmra.mxu0 %v2369
        %v2427 = vpop.f32.mrf.mxu0
        %v2428 = vadd.f32 0.0, %v2427
        %2429 = vmatmul.f32.gmra.mxu0 %v2372
        %v2430 = vpop.f32.mrf.mxu0
        %v2431 = vadd.f32 0.0, %v2430
        %2432 = vmatmul.f32.gmra.mxu0 %v2375
        %v2433 = vpop.f32.mrf.mxu0
        %v2434 = vadd.f32 0.0, %v2433
        %2435 = vmatmul.f32.gmra.mxu0 %v2378
        %v2436 = vpop.f32.mrf.mxu0
        %v2437 = vadd.f32 0.0, %v2436
        %2438 = vdwg.mxu0
        %v2440 = vsel %vm619, %v2309, 0
        %v2443 = vsel %vm619, %v2310, 0
        %v2446 = vsel %vm619, %v2311, 0
        %v2449 = vsel %vm619, %v2312, 0
        %v2452 = vsel %vm619, %v2313, 0
        %v2455 = vsel %vm619, %v2314, 0
        %v2458 = vsel %vm619, %v2315, 0
        %v2461 = vsel %vm619, %v2316, 0
        %v2464 = vsel %vm619, %v2317, 0
        %v2467 = vsel %vm619, %v2318, 0
        %v2470 = vsel %vm619, %v2319, 0
        %v2473 = vsel %vm619, %v2320, 0
        %v2476 = vsel %vm619, %v2321, 0
        %v2479 = vsel %vm619, %v2322, 0
        %2481 = vmatpush.msra.mxu0 0.0
        %2482 = vmatpush.msra.mxu0 0.0
        %2483 = vmatpush.msra.mxu0 %v2265
        %2484 = vmatpush.msra.mxu0 %v2264
        %2485 = vmatpush.msra.mxu0 %v2263
        %2486 = vmatpush.msra.mxu0 %v2262
        %2487 = vmatpush.msra.mxu0 %v2261
        %2488 = vmatpush.msra.mxu0 %v2260
        %2489 = vmatpush.msra.mxu0 %v2259
        %2490 = vmatpush.msra.mxu0 %v2258
        %2491 = vmatpush.msra.mxu0 %v2257
        %2492 = vmatpush.msra.mxu0 %v2256
        %2493 = vmatpush.msra.mxu0 %v2255
        %2494 = vmatpush.msra.mxu0 %v2254
        %2495 = vmatpush.msra.mxu0 %v2253
        %2496 = vmatpush.msra.mxu0 %v2252
        %2497 = vmatmul.f32.gmra.mxu0 %v2440
        %v2498 = vpop.f32.mrf.mxu0
        %v2499 = vadd.f32 %v2398, %v2498
        %2500 = vmatmul.f32.gmra.mxu0 %v2443
        %v2501 = vpop.f32.mrf.mxu0
        %v2502 = vadd.f32 %v2401, %v2501
        %2503 = vmatmul.f32.gmra.mxu0 %v2446
        %v2504 = vpop.f32.mrf.mxu0
        %v2505 = vadd.f32 %v2404, %v2504
        %2506 = vmatmul.f32.gmra.mxu0 %v2449
        %v2507 = vpop.f32.mrf.mxu0
        %v2508 = vadd.f32 %v2407, %v2507
        %2509 = vmatmul.f32.gmra.mxu0 %v2452
        %v2510 = vpop.f32.mrf.mxu0
        %v2511 = vadd.f32 %v2410, %v2510
        %2512 = vmatmul.f32.gmra.mxu0 %v2455
        %v2513 = vpop.f32.mrf.mxu0
        %v2514 = vadd.f32 %v2413, %v2513
        %2515 = vmatmul.f32.gmra.mxu0 %v2458
        %v2516 = vpop.f32.mrf.mxu0
        %v2517 = vadd.f32 %v2416, %v2516
        %2518 = vmatmul.f32.gmra.mxu0 %v2461
        %v2519 = vpop.f32.mrf.mxu0
        %v2520 = vadd.f32 %v2419, %v2519
        %2521 = vmatmul.f32.gmra.mxu0 %v2464
        %v2522 = vpop.f32.mrf.mxu0
        %v2523 = vadd.f32 %v2422, %v2522
        %2524 = vmatmul.f32.gmra.mxu0 %v2467
        %v2525 = vpop.f32.mrf.mxu0
        %v2526 = vadd.f32 %v2425, %v2525
        %2527 = vmatmul.f32.gmra.mxu0 %v2470
        %v2528 = vpop.f32.mrf.mxu0
        %v2529 = vadd.f32 %v2428, %v2528
        %2530 = vmatmul.f32.gmra.mxu0 %v2473
        %v2531 = vpop.f32.mrf.mxu0
        %v2532 = vadd.f32 %v2431, %v2531
        %2533 = vmatmul.f32.gmra.mxu0 %v2476
        %v2534 = vpop.f32.mrf.mxu0
        %v2535 = vadd.f32 %v2434, %v2534
        %2536 = vmatmul.f32.gmra.mxu0 %v2479
        %v2537 = vpop.f32.mrf.mxu0
        %v2538 = vadd.f32 %v2437, %v2537
        %2539 = vdwg.mxu0
        %s2540 = scalar_lea.vmem [#allocation2], 1232
        %v2541 = vld [vmem:[%s2540] sm:$0xff]
        %v2542 = vld [vmem:[%s2540 + $0x8] sm:$0xff]
        %v2543 = vld [vmem:[%s2540 + $0x10] sm:$0xff]
        %v2544 = vld [vmem:[%s2540 + $0x18] sm:$0xff]
        %v2545 = vld [vmem:[%s2540 + $0x20] sm:$0xff]
        %v2546 = vld [vmem:[%s2540 + $0x28] sm:$0xff]
        %v2547 = vld [vmem:[%s2540 + $0x30] sm:$0xff]
        %v2548 = vld [vmem:[%s2540 + $0x38] sm:$0xff]
        %v2549 = vld [vmem:[%s2540 + $0x40] sm:$0xff]
        %v2550 = vld [vmem:[%s2540 + $0x48] sm:$0xff]
        %v2551 = vld [vmem:[%s2540 + $0x50] sm:$0xff]
        %v2552 = vld [vmem:[%s2540 + $0x58] sm:$0xff]
        %v2553 = vld [vmem:[%s2540 + $0x60] sm:$0xff]
        %v2554 = vld [vmem:[%s2540 + $0x68] sm:$0xff]
        %v2556 = vsel %vm619, %v2541, 0
        %v2559 = vsel %vm619, %v2542, 0
        %v2562 = vsel %vm619, %v2543, 0
        %v2565 = vsel %vm619, %v2544, 0
        %v2568 = vsel %vm619, %v2545, 0
        %v2571 = vsel %vm619, %v2546, 0
        %v2574 = vsel %vm619, %v2547, 0
        %v2577 = vsel %vm619, %v2548, 0
        %v2580 = vsel %vm619, %v2549, 0
        %v2583 = vsel %vm619, %v2550, 0
        %v2586 = vsel %vm619, %v2551, 0
        %v2589 = vsel %vm619, %v2552, 0
        %v2592 = vsel %vm619, %v2553, 0
        %v2595 = vsel %vm619, %v2554, 0
        %2597 = vmatpush.msra.mxu0 0.0
        %2598 = vmatpush.msra.mxu0 0.0
        %2599 = vmatpush.msra.mxu0 %v2307
        %2600 = vmatpush.msra.mxu0 %v2306
        %2601 = vmatpush.msra.mxu0 %v2305
        %2602 = vmatpush.msra.mxu0 %v2304
        %2603 = vmatpush.msra.mxu0 %v2303
        %2604 = vmatpush.msra.mxu0 %v2302
        %2605 = vmatpush.msra.mxu0 %v2301
        %2606 = vmatpush.msra.mxu0 %v2300
        %2607 = vmatpush.msra.mxu0 %v2299
        %2608 = vmatpush.msra.mxu0 %v2298
        %2609 = vmatpush.msra.mxu0 %v2297
        %2610 = vmatpush.msra.mxu0 %v2296
        %2611 = vmatpush.msra.mxu0 %v2295
        %2612 = vmatpush.msra.mxu0 %v2294
        %2613 = vmatmul.f32.gmra.mxu0 %v2556
        %v2614 = vpop.f32.mrf.mxu0
        %v2615 = vadd.f32 0.0, %v2614
        %2616 = vmatmul.f32.gmra.mxu0 %v2559
        %v2617 = vpop.f32.mrf.mxu0
        %v2618 = vadd.f32 0.0, %v2617
        %2619 = vmatmul.f32.gmra.mxu0 %v2562
        %v2620 = vpop.f32.mrf.mxu0
        %v2621 = vadd.f32 0.0, %v2620
        %2622 = vmatmul.f32.gmra.mxu0 %v2565
        %v2623 = vpop.f32.mrf.mxu0
        %v2624 = vadd.f32 0.0, %v2623
        %2625 = vmatmul.f32.gmra.mxu0 %v2568
        %v2626 = vpop.f32.mrf.mxu0
        %v2627 = vadd.f32 0.0, %v2626
        %2628 = vmatmul.f32.gmra.mxu0 %v2571
        %v2629 = vpop.f32.mrf.mxu0
        %v2630 = vadd.f32 0.0, %v2629
        %2631 = vmatmul.f32.gmra.mxu0 %v2574
        %v2632 = vpop.f32.mrf.mxu0
        %v2633 = vadd.f32 0.0, %v2632
        %2634 = vmatmul.f32.gmra.mxu0 %v2577
        %v2635 = vpop.f32.mrf.mxu0
        %v2636 = vadd.f32 0.0, %v2635
        %2637 = vmatmul.f32.gmra.mxu0 %v2580
        %v2638 = vpop.f32.mrf.mxu0
        %v2639 = vadd.f32 0.0, %v2638
        %2640 = vmatmul.f32.gmra.mxu0 %v2583
        %v2641 = vpop.f32.mrf.mxu0
        %v2642 = vadd.f32 0.0, %v2641
        %2643 = vmatmul.f32.gmra.mxu0 %v2586
        %v2644 = vpop.f32.mrf.mxu0
        %v2645 = vadd.f32 0.0, %v2644
        %2646 = vmatmul.f32.gmra.mxu0 %v2589
        %v2647 = vpop.f32.mrf.mxu0
        %v2648 = vadd.f32 0.0, %v2647
        %2649 = vmatmul.f32.gmra.mxu0 %v2592
        %v2650 = vpop.f32.mrf.mxu0
        %v2651 = vadd.f32 0.0, %v2650
        %2652 = vmatmul.f32.gmra.mxu0 %v2595
        %v2653 = vpop.f32.mrf.mxu0
        %v2654 = vadd.f32 0.0, %v2653
        %2655 = vdwg.mxu0
        %v2656 = vadd.f32 %v2499, %v2615
        %v2657 = vadd.f32 %v2502, %v2618
        %v2658 = vadd.f32 %v2505, %v2621
        %v2659 = vadd.f32 %v2508, %v2624
        %v2660 = vadd.f32 %v2511, %v2627
        %v2661 = vadd.f32 %v2514, %v2630
        %v2662 = vadd.f32 %v2517, %v2633
        %v2663 = vadd.f32 %v2520, %v2636
        %v2664 = vadd.f32 %v2523, %v2639
        %v2665 = vadd.f32 %v2526, %v2642
        %v2666 = vadd.f32 %v2529, %v2645
        %v2667 = vadd.f32 %v2532, %v2648
        %v2668 = vadd.f32 %v2535, %v2651
        %v2669 = vadd.f32 %v2538, %v2654
        %s2670 = scalar_lea.vmem %s4, 336
        %v2671 = vld [vmem:[%s2670] sm:$0xff]
        %v2672 = vld [vmem:[%s2670 + $0x8] sm:$0xff]
        %v2673 = vld [vmem:[%s2670 + $0x10] sm:$0xff]
        %v2674 = vld [vmem:[%s2670 + $0x18] sm:$0xff]
        %v2675 = vld [vmem:[%s2670 + $0x20] sm:$0xff]
        %v2676 = vld [vmem:[%s2670 + $0x28] sm:$0xff]
        %v2677 = vld [vmem:[%s2670 + $0x30] sm:$0xff]
        %v2678 = vld [vmem:[%s2670 + $0x38] sm:$0xff]
        %v2679 = vld [vmem:[%s2670 + $0x40] sm:$0xff]
        %v2680 = vld [vmem:[%s2670 + $0x48] sm:$0xff]
        %v2681 = vld [vmem:[%s2670 + $0x50] sm:$0xff]
        %v2682 = vld [vmem:[%s2670 + $0x58] sm:$0xff]
        %v2683 = vld [vmem:[%s2670 + $0x60] sm:$0xff]
        %v2684 = vld [vmem:[%s2670 + $0x68] sm:$0xff]
        %2686 = vset.pattern.permute.xlu0 0
        %2687 = vperm.xlu0 %2686, %v2671
        %v2688 = vpop.permute.xlu0 %2687
        %2691 = vset.pattern.permute.xlu0 0
        %2692 = vperm.xlu0 %2691, %v2672
        %v2693 = vpop.permute.xlu0 %2692
        %2696 = vset.pattern.permute.xlu0 0
        %2697 = vperm.xlu0 %2696, %v2673
        %v2698 = vpop.permute.xlu0 %2697
        %2701 = vset.pattern.permute.xlu0 0
        %2702 = vperm.xlu0 %2701, %v2674
        %v2703 = vpop.permute.xlu0 %2702
        %2706 = vset.pattern.permute.xlu0 0
        %2707 = vperm.xlu0 %2706, %v2675
        %v2708 = vpop.permute.xlu0 %2707
        %2711 = vset.pattern.permute.xlu0 0
        %2712 = vperm.xlu0 %2711, %v2676
        %v2713 = vpop.permute.xlu0 %2712
        %2716 = vset.pattern.permute.xlu0 0
        %2717 = vperm.xlu0 %2716, %v2677
        %v2718 = vpop.permute.xlu0 %2717
        %2721 = vset.pattern.permute.xlu0 0
        %2722 = vperm.xlu0 %2721, %v2678
        %v2723 = vpop.permute.xlu0 %2722
        %2726 = vset.pattern.permute.xlu0 0
        %2727 = vperm.xlu0 %2726, %v2679
        %v2728 = vpop.permute.xlu0 %2727
        %2731 = vset.pattern.permute.xlu0 0
        %2732 = vperm.xlu0 %2731, %v2680
        %v2733 = vpop.permute.xlu0 %2732
        %2736 = vset.pattern.permute.xlu0 0
        %2737 = vperm.xlu0 %2736, %v2681
        %v2738 = vpop.permute.xlu0 %2737
        %2741 = vset.pattern.permute.xlu0 0
        %2742 = vperm.xlu0 %2741, %v2682
        %v2743 = vpop.permute.xlu0 %2742
        %2746 = vset.pattern.permute.xlu0 0
        %2747 = vperm.xlu0 %2746, %v2683
        %v2748 = vpop.permute.xlu0 %2747
        %2751 = vset.pattern.permute.xlu0 0
        %2752 = vperm.xlu0 %2751, %v2684
        %v2753 = vpop.permute.xlu0 %2752
        %v2755 = vadd.f32 %v2656, %v2688
        %v2756 = vadd.f32 %v2657, %v2693
        %v2757 = vadd.f32 %v2658, %v2698
        %v2758 = vadd.f32 %v2659, %v2703
        %v2759 = vadd.f32 %v2660, %v2708
        %v2760 = vadd.f32 %v2661, %v2713
        %v2761 = vadd.f32 %v2662, %v2718
        %v2762 = vadd.f32 %v2663, %v2723
        %v2763 = vadd.f32 %v2664, %v2728
        %v2764 = vadd.f32 %v2665, %v2733
        %v2765 = vadd.f32 %v2666, %v2738
        %v2766 = vadd.f32 %v2667, %v2743
        %v2767 = vadd.f32 %v2668, %v2748
        %v2768 = vadd.f32 %v2669, %v2753
        %v2769 = vmax.f32 %v2755, 0.0
        %v2770 = vmax.f32 %v2756, 0.0
        %v2771 = vmax.f32 %v2757, 0.0
        %v2772 = vmax.f32 %v2758, 0.0
        %v2773 = vmax.f32 %v2759, 0.0
        %v2774 = vmax.f32 %v2760, 0.0
        %v2775 = vmax.f32 %v2761, 0.0
        %v2776 = vmax.f32 %v2762, 0.0
        %v2777 = vmax.f32 %v2763, 0.0
        %v2778 = vmax.f32 %v2764, 0.0
        %v2779 = vmax.f32 %v2765, 0.0
        %v2780 = vmax.f32 %v2766, 0.0
        %v2781 = vmax.f32 %v2767, 0.0
        %v2782 = vmax.f32 %v2768, 0.0
        %v2783 = vadd.f32 %v2769, %v2210
        %v2784 = vadd.f32 %v2770, %v2211
        %v2785 = vadd.f32 %v2771, %v2212
        %v2786 = vadd.f32 %v2772, %v2213
        %v2787 = vadd.f32 %v2773, %v2214
        %v2788 = vadd.f32 %v2774, %v2215
        %v2789 = vadd.f32 %v2775, %v2216
        %v2790 = vadd.f32 %v2776, %v2217
        %v2791 = vadd.f32 %v2777, %v2218
        %v2792 = vadd.f32 %v2778, %v2219
        %v2793 = vadd.f32 %v2779, %v2220
        %v2794 = vadd.f32 %v2780, %v2221
        %v2795 = vadd.f32 %v2781, %v2222
        %v2796 = vadd.f32 %v2782, %v2223
        %v2797 = vld [vmem:[%s5] sm:$0xff]
        %v2798 = vld [vmem:[%s5 + $0x8] sm:$0xff]
        %v2799 = vld [vmem:[%s5 + $0x10] sm:$0xff]
        %v2800 = vld [vmem:[%s5 + $0x18] sm:$0xff]
        %v2801 = vld [vmem:[%s5 + $0x20] sm:$0xff]
        %v2802 = vld [vmem:[%s5 + $0x28] sm:$0xff]
        %v2803 = vld [vmem:[%s5 + $0x30] sm:$0xff]
        %v2804 = vld [vmem:[%s5 + $0x38] sm:$0xff]
        %v2805 = vld [vmem:[%s6] sm:$0xff]
        %v2806 = vld [vmem:[%s6 + $0x8] sm:$0xff]
        %v2807 = vld [vmem:[%s6 + $0x10] sm:$0xff]
        %v2808 = vld [vmem:[%s6 + $0x18] sm:$0xff]
        %v2809 = vld [vmem:[%s6 + $0x20] sm:$0xff]
        %v2810 = vld [vmem:[%s6 + $0x28] sm:$0xff]
        %v2811 = vld [vmem:[%s6 + $0x30] sm:$0xff]
        %v2812 = vld [vmem:[%s6 + $0x38] sm:$0xff]
        %2814 = vset.pattern.permute.xlu0 0
        %2815 = vperm.xlu0 %2814, %v2805
        %v2816 = vpop.permute.xlu0 %2815
        %2819 = vset.pattern.permute.xlu0 0
        %2820 = vperm.xlu0 %2819, %v2806
        %v2821 = vpop.permute.xlu0 %2820
        %2824 = vset.pattern.permute.xlu0 0
        %2825 = vperm.xlu0 %2824, %v2807
        %v2826 = vpop.permute.xlu0 %2825
        %2829 = vset.pattern.permute.xlu0 0
        %2830 = vperm.xlu0 %2829, %v2808
        %v2831 = vpop.permute.xlu0 %2830
        %2834 = vset.pattern.permute.xlu0 0
        %2835 = vperm.xlu0 %2834, %v2809
        %v2836 = vpop.permute.xlu0 %2835
        %2839 = vset.pattern.permute.xlu0 0
        %2840 = vperm.xlu0 %2839, %v2810
        %v2841 = vpop.permute.xlu0 %2840
        %2844 = vset.pattern.permute.xlu0 0
        %2845 = vperm.xlu0 %2844, %v2811
        %v2846 = vpop.permute.xlu0 %2845
        %2849 = vset.pattern.permute.xlu0 0
        %2850 = vperm.xlu0 %2849, %v2812
        %v2851 = vpop.permute.xlu0 %2850
        %v2854 = vsel %vm619, %v2797, 0
        %v2857 = vsel %vm619, %v2798, 0
        %v2860 = vsel %vm619, %v2799, 0
        %v2863 = vsel %vm619, %v2800, 0
        %v2866 = vsel %vm619, %v2801, 0
        %v2869 = vsel %vm619, %v2802, 0
        %v2872 = vsel %vm619, %v2803, 0
        %v2875 = vsel %vm619, %v2804, 0
        %2877 = vmatpush.msra.mxu0 0.0
        %2878 = vmatpush.msra.mxu0 0.0
        %2879 = vmatpush.msra.mxu0 %v2796
        %2880 = vmatpush.msra.mxu0 %v2795
        %2881 = vmatpush.msra.mxu0 %v2794
        %2882 = vmatpush.msra.mxu0 %v2793
        %2883 = vmatpush.msra.mxu0 %v2792
        %2884 = vmatpush.msra.mxu0 %v2791
        %2885 = vmatpush.msra.mxu0 %v2790
        %2886 = vmatpush.msra.mxu0 %v2789
        %2887 = vmatpush.msra.mxu0 %v2788
        %2888 = vmatpush.msra.mxu0 %v2787
        %2889 = vmatpush.msra.mxu0 %v2786
        %2890 = vmatpush.msra.mxu0 %v2785
        %2891 = vmatpush.msra.mxu0 %v2784
        %2892 = vmatpush.msra.mxu0 %v2783
        %2893 = vmatmul.f32.gmra.mxu0 %v2854
        %v2894 = vpop.f32.mrf.mxu0
        %v2895 = vadd.f32 %v2816, %v2894
        %2896 = vmatmul.f32.gmra.mxu0 %v2857
        %v2897 = vpop.f32.mrf.mxu0
        %v2898 = vadd.f32 %v2821, %v2897
        %2899 = vmatmul.f32.gmra.mxu0 %v2860
        %v2900 = vpop.f32.mrf.mxu0
        %v2901 = vadd.f32 %v2826, %v2900
        %2902 = vmatmul.f32.gmra.mxu0 %v2863
        %v2903 = vpop.f32.mrf.mxu0
        %v2904 = vadd.f32 %v2831, %v2903
        %2905 = vmatmul.f32.gmra.mxu0 %v2866
        %v2906 = vpop.f32.mrf.mxu0
        %v2907 = vadd.f32 %v2836, %v2906
        %2908 = vmatmul.f32.gmra.mxu0 %v2869
        %v2909 = vpop.f32.mrf.mxu0
        %v2910 = vadd.f32 %v2841, %v2909
        %2911 = vmatmul.f32.gmra.mxu0 %v2872
        %v2912 = vpop.f32.mrf.mxu0
        %v2913 = vadd.f32 %v2846, %v2912
        %2914 = vmatmul.f32.gmra.mxu0 %v2875
        %v2915 = vpop.f32.mrf.mxu0
        %v2916 = vadd.f32 %v2851, %v2915
        %2917 = vdwg.mxu0
        %v2918 = vadd.f32 %v2895, %v294
        %v2919 = vadd.f32 %v2898, %v295
        %v2920 = vadd.f32 %v2901, %v296
        %v2921 = vadd.f32 %v2904, %v297
        %v2922 = vadd.f32 %v2907, %v298
        %v2923 = vadd.f32 %v2910, %v299
        %v2924 = vadd.f32 %v2913, %v300
        %v2925 = vadd.f32 %v2916, %v301
        %2926 = vst [vmem:[%s288] sm:$0xff] %v2918
        %2927 = vst [vmem:[%s288 + $0x8] sm:$0xff] %v2919
        %2928 = vst [vmem:[%s288 + $0x10] sm:$0xff] %v2920
        %2929 = vst [vmem:[%s288 + $0x18] sm:$0xff] %v2921
        %2930 = vst [vmem:[%s288 + $0x20] sm:$0xff] %v2922
        %2931 = vst [vmem:[%s288 + $0x28] sm:$0xff] %v2923
        %2932 = vst [vmem:[%s288 + $0x30] sm:$0xff] %v2924
        %2933 = vst [vmem:[%s288 + $0x38] sm:$0xff] %v2925
        %s2934 = sand.u32 %s182, 1
        %s2935 = scalar_lea.sflag [#allocation4], %s2934
        %s2936 = sand.u32 %s182, 1
        %s2937 = smul.addr %s2936, 64
        %s2938 = scalar_lea.vmem [#allocation5], %s2937
        // Predicated region
        $region53: #{encoder_forward.1} parent=47 // pred_check
          %p2939 = pneg %p192
        $region54: #{encoder_forward.1} parent=47 // pred_check_branch
          %2941 = sbr.rel (%p2939) target = $region56
        $region55: #{encoder_forward.1} parent=47 // pred_region
          %2943 = vsyncadd %s2935, 0
          %s2944 = smul.addr %s22, 8
          %s2945 = smul.addr %s2944, 8
          %s2946 = scalar_lea.hbm %s7, %s2945
          %s2947 = sshll.u32 %s2938, 4
          %s2948 = int_to_ptr.vmem [resolvable:$true] %s2947
          %s2949 = sshll.u32 %s2946, 4
          %s2950 = int_to_ptr.hbm [resolvable:$true] %s2949
          %2955 = dma.vmem_to_hbm [thread:$0]  %s2948, 1024, %s2950, %s2935, 128, 128, 8
        $region56: #{encoder_forward.1} parent=47 // pred_fallthru
          _
      $region48: #{encoder_forward.1} parent=5 // pred_fallthru
        _
      %p2956 = scmp.le.s32.totalorder 2, %s17
      // Predicated region
      $region57: #{encoder_forward.1} parent=5 // pred_check
        %p2957 = pneg %p2956
      $region58: #{encoder_forward.1} parent=5 // pred_check_branch
        %2959 = sbr.rel (%p2957) target = $region60
      $region59: #{encoder_forward.1} parent=5 // pred_region
        %s2960 = ssub.s32 %s17, 2
        // Predicated region
        $region61: #{encoder_forward.1} parent=59 // pred_check
          %p2961 = pneg %p198
        $region62: #{encoder_forward.1} parent=59 // pred_check_branch
          %2963 = sbr.rel (%p2961) target = $region64
        $region63: #{encoder_forward.1} parent=59 // pred_region
          %s2964 = sand.u32 %s183, 1
          %s2965 = scalar_lea.sflag [#allocation4], %s2964
          %s2966 = sand.u32 %s183, 1
          %s2967 = smul.addr %s2966, 64
          %s2968 = scalar_lea.vmem [#allocation5], %s2967
          %2970 = dma.done %s2965, 1024
        $region64: #{encoder_forward.1} parent=59 // pred_fallthru
          _
      $region60: #{encoder_forward.1} parent=5 // pred_fallthru
        _
    $region6: #{encoder_forward.1} parent=1 // loop_footer
      %s21 = sadd.s32 1, %s17
    $region7: #{encoder_forward.1} parent=1 // loop_footer_branch
      %16 = sbr.rel target = $region3
    $region8: #{encoder_forward.1} parent=1 // loop_exit
      _
    %2971 = vsyncpa [#allocation3], 1
    %s2972 = scalar_lea.sflag [#allocation3], 1
    %2973 = vsyncpa %s2972, 1
    %2974 = vsyncpa [#allocation4], 1
    %s2975 = scalar_lea.sflag [#allocation4], 1
    %2976 = vsyncpa %s2975, 1

</llo_original>
